<compile_context>
chip_gen: v6e
topology: v6e:2x2x1
jax: 0.10.0
libtpu: 0.0.40
codegen_flags: <defaults>
</compile_context>

<pallas_src>
import jax
import jax.numpy as jnp
from jax.experimental import pallas as pl
from jax.experimental.pallas import tpu as pltpu


def _round_up(a, m):
    return ((a + m - 1) // m) * m


def make_pos_embedding(max_logscale, N_freqs, logscale=True,
                       block_lanes=32768, out_dtype=None,
                       use_double_angle=False, channel_major_io=False):
    """Returns a callable x:(B,C) -> (B, C*(2*N_freqs+1)) using a Pallas kernel.

    If channel_major_io=True, the callable instead takes (C, B) and returns
    (D, B) (lane-dense channel-major) with no wrapper transposes - the layout
    a downstream MLP matmul can consume directly.
    """
    if logscale:
        freqs = 2.0 ** jnp.linspace(0.0, float(max_logscale), N_freqs)
    else:
        freqs = jnp.linspace(1.0, 2.0 ** float(max_logscale), N_freqs)
    # Static python floats -- baked into the kernel (no weights to load).
    freqs = tuple(float(f) for f in jax.device_get(freqs))
    n_parts = 2 * len(freqs) + 1

    # Double-angle recurrence is only exact when each freq is 2x the previous.
    doubling = all(freqs[i + 1] == 2.0 * freqs[i] for i in range(len(freqs) - 1))
    use_rec = bool(use_double_angle and doubling and len(freqs) > 1)

    def _call_channel_major(x_cm):
        # x_cm: (C, B) channel-major, batch on the lane axis.
        C, B = x_cm.shape
        D = C * n_parts
        odt = x_cm.dtype if out_dtype is None else out_dtype
        out_isz = jnp.dtype(odt).itemsize

        # ---- tile sizing: (., tbs, 128) dense blocks --------------------
        nb = pl.cdiv(B, 128)                          # 128-lane rows of batch
        # Cap from requested lanes, rounded to a whole number of sublane tiles.
        tbs_cap = max(8, (int(block_lanes) // 128 // 8) * 8)
        # Conservative VMEM budget (double-buffered f32 in+out), safe on v7x.
        per_row_bytes = 2 * (C + D) * 128 * 4
        budget = 40 * 1024 * 1024
        tbs_cap = min(tbs_cap, max(8, (budget // per_row_bytes // 8) * 8))
        if nb > 8:
            # Keep at least 2 grid steps so v7x's two TensorCores both get work.
            tbs = min(tbs_cap, _round_up(pl.cdiv(nb, 2), 8))
        else:
            tbs = 8
        nb_pad = _round_up(nb, tbs)
        B_pad = nb_pad * 128

        if B_pad != B:
            x_cm = jnp.pad(x_cm, ((0, 0), (0, B_pad - B)))
        x3 = x_cm.reshape(C, nb_pad, 128)             # free contiguous reshape
        grid = (nb_pad // tbs,)

        def kernel(x_ref, o_ref):
            for c in range(C):                        # C is tiny (3): unrolled
                xc = x_ref[c].astype(jnp.float32)     # (tbs, 128), dense slab
                o_ref[c] = xc.astype(o_ref.dtype)     # part 0: identity
                if use_rec:
                    s = jnp.sin(freqs[0] * xc)
                    co = jnp.cos(freqs[0] * xc)
                    o_ref[C + c] = s.astype(o_ref.dtype)
                    o_ref[2 * C + c] = co.astype(o_ref.dtype)
                    for k in range(1, len(freqs)):    # VPU-only doubling
                        s, co = 2.0 * s * co, 1.0 - 2.0 * s * s
                        o_ref[(2 * k + 1) * C + c] = s.astype(o_ref.dtype)
                        o_ref[(2 * k + 2) * C + c] = co.astype(o_ref.dtype)
                else:
                    for k, f in enumerate(freqs):     # unrolled sin/cos
                        fx = f * xc
                        o_ref[(2 * k + 1) * C + c] = jnp.sin(fx).astype(o_ref.dtype)
                        o_ref[(2 * k + 2) * C + c] = jnp.cos(fx).astype(o_ref.dtype)

        in_block_bytes = C * tbs * 128 * x_cm.dtype.itemsize
        out_block_bytes = D * tbs * 128 * out_isz
        vmem_limit = int(2 * (in_block_bytes + out_block_bytes) + (4 << 20))

        cost = pl.CostEstimate(
            flops=int(3 * len(freqs) * B * C),
            transcendentals=int(2 * len(freqs) * B * C),
            bytes_accessed=int(B * (C * x_cm.dtype.itemsize + D * out_isz)),
        )

        out3 = pl.pallas_call(
            kernel,
            out_shape=jax.ShapeDtypeStruct((D, nb_pad, 128), odt),
            grid_spec=pltpu.PrefetchScalarGridSpec(
                num_scalar_prefetch=0,
                grid=grid,
                in_specs=[pl.BlockSpec((C, tbs, 128), lambda i: (0, i, 0))],
                out_specs=pl.BlockSpec((D, tbs, 128), lambda i: (0, i, 0)),
            ),
            compiler_params=pltpu.CompilerParams(
                dimension_semantics=("parallel",),
                vmem_limit_bytes=vmem_limit,
            ),
            cost_estimate=cost,
        )(x3)

        out_cm = out3.reshape(D, B_pad)               # free contiguous reshape
        if B_pad != B:
            out_cm = out_cm[:, :B]
        return out_cm

    def fn(x):
        if channel_major_io:
            return _call_channel_major(x)
        # Batch-major (B, C) in / (B, D) out, matching the PyTorch module.
        # The two transposes are wrapper-side XLA ops that roughly double HBM
        # traffic; production pipelines should use channel_major_io=True and
        # feed the (D, B) slab straight into the downstream matmul.
        out_cm = _call_channel_major(x.T)
        return out_cm.T

    return fn


def pos_embedding_ref(x, max_logscale, N_freqs, logscale=True):
    """Pure-JAX reference mirroring the PyTorch forward."""
    if logscale:
        freqs = 2.0 ** jnp.linspace(0.0, float(max_logscale), N_freqs)
    else:
        freqs = jnp.linspace(1.0, 2.0 ** float(max_logscale), N_freqs)
    out = [x]
    for f in freqs:
        out.append(jnp.sin(f * x))
        out.append(jnp.cos(f * x))
    return jnp.concatenate(out, axis=-1)


if __name__ == "__main__":
    max_logscale = 3
    N_freqs = 4
    B, C = 16, 3
    D = C * (2 * N_freqs + 1)

    key = jax.random.PRNGKey(0)
    x = jax.random.normal(key, (B, C), dtype=jnp.float32)

    # Exact sin/cos path, batch-major API (matches the PyTorch module).
    embed = make_pos_embedding(max_logscale, N_freqs, logscale=True)
    out = jax.block_until_ready(embed(x))
    ref = pos_embedding_ref(x, max_logscale, N_freqs, logscale=True)
    assert out.shape == (B, D), out.shape
    assert jnp.allclose(out, ref, atol=1e-6, rtol=1e-6), "mismatch vs reference"

    # Odd batch size + channel-major (production) path: (C,B) -> (D,B).
    x2 = jax.random.normal(jax.random.PRNGKey(1), (137, C), dtype=jnp.float32)
    embed_cm = make_pos_embedding(max_logscale, N_freqs, logscale=True,
                                  channel_major_io=True)
    out2 = jax.block_until_ready(embed_cm(x2.T))
    ref2 = pos_embedding_ref(x2, max_logscale, N_freqs, logscale=True)
    assert out2.shape == (D, 137), out2.shape
    assert jnp.allclose(out2.T, ref2, atol=1e-6, rtol=1e-6), "mismatch (channel-major)"

    # Double-angle recurrence variant (compute-bound micro-opt); slightly
    # looser tolerance for accumulated f32 error at higher freqs.
    embed_da = make_pos_embedding(max_logscale, N_freqs, logscale=True,
                                  use_double_angle=True)
    out3 = jax.block_until_ready(embed_da(x))
    assert jnp.allclose(out3, ref, atol=1e-4, rtol=1e-4), "mismatch (double-angle)"

    # Linear (non-logscale) frequencies.
    embed_lin = make_pos_embedding(max_logscale, N_freqs, logscale=False)
    out4 = jax.block_until_ready(embed_lin(x))
    ref4 = pos_embedding_ref(x, max_logscale, N_freqs, logscale=False)
    assert jnp.allclose(out4, ref4, atol=1e-6, rtol=1e-6), "mismatch (linear freqs)"

    print("KERNEL_OK")
</pallas_src>

<mosaic_0001>
module attributes {stable_mosaic.version = 11 : i64} {
  func.func @kernel(%arg0: i32, %arg1: memref<3x8x128xf32, #tpu.memory_space<vmem>>, %arg2: memref<27x8x128xf32, #tpu.memory_space<vmem>>) attributes {dimension_semantics = [#tpu.dimension_semantics<parallel>], iteration_bounds = array<i64: 1>, scalar_prefetch = 0 : i64, scratch_operands = 0 : i64, tpu.core_type = #tpu.core_type<tc>, window_params = [{transform_indices = @transform_0, window_bounds = array<i64: 3, 8, 128>}, {transform_indices = @transform_1, window_bounds = array<i64: 27, 8, 128>}]} {
    %c0 = arith.constant 0 : index
    %c0_0 = arith.constant 0 : index
    %c0_1 = arith.constant 0 : index
    %0 = vector.load %arg1[%c0, %c0_0, %c0_1] : memref<3x8x128xf32, #tpu.memory_space<vmem>>, vector<1x8x128xf32>
    %1 = vector.shape_cast %0 : vector<1x8x128xf32> to vector<8x128xf32>
    %c0_2 = arith.constant 0 : index
    %c0_3 = arith.constant 0 : index
    %c0_4 = arith.constant 0 : index
    %2 = vector.load %arg2[%c0_2, %c0_3, %c0_4] : memref<27x8x128xf32, #tpu.memory_space<vmem>>, vector<1x8x128xf32>
    %3 = vector.shape_cast %2 : vector<1x8x128xf32> to vector<8x128xf32>
    %4 = vector.shape_cast %1 : vector<8x128xf32> to vector<1x8x128xf32>
    tpu.vector_store %arg2[%c0_2, %c0_3, %c0_4], %4 {strides = array<i32>} : memref<27x8x128xf32, #tpu.memory_space<vmem>>, vector<1x8x128xf32>,
    %cst = arith.constant 1.000000e+00 : f32
    %5 = vector.broadcast %cst : f32 to vector<8x128xf32>
    %6 = arith.mulf %5, %1 : vector<8x128xf32>
    %7 = math.sin %6 : vector<8x128xf32>
    %c3 = arith.constant 3 : index
    %c0_5 = arith.constant 0 : index
    %c0_6 = arith.constant 0 : index
    %8 = vector.load %arg2[%c3, %c0_5, %c0_6] : memref<27x8x128xf32, #tpu.memory_space<vmem>>, vector<1x8x128xf32>
    %9 = vector.shape_cast %8 : vector<1x8x128xf32> to vector<8x128xf32>
    %10 = vector.shape_cast %7 : vector<8x128xf32> to vector<1x8x128xf32>
    tpu.vector_store %arg2[%c3, %c0_5, %c0_6], %10 {strides = array<i32>} : memref<27x8x128xf32, #tpu.memory_space<vmem>>, vector<1x8x128xf32>,
    %11 = math.cos %6 : vector<8x128xf32>
    %c6 = arith.constant 6 : index
    %c0_7 = arith.constant 0 : index
    %c0_8 = arith.constant 0 : index
    %12 = vector.load %arg2[%c6, %c0_7, %c0_8] : memref<27x8x128xf32, #tpu.memory_space<vmem>>, vector<1x8x128xf32>
    %13 = vector.shape_cast %12 : vector<1x8x128xf32> to vector<8x128xf32>
    %14 = vector.shape_cast %11 : vector<8x128xf32> to vector<1x8x128xf32>
    tpu.vector_store %arg2[%c6, %c0_7, %c0_8], %14 {strides = array<i32>} : memref<27x8x128xf32, #tpu.memory_space<vmem>>, vector<1x8x128xf32>,
    %cst_9 = arith.constant 2.000000e+00 : f32
    %15 = vector.broadcast %cst_9 : f32 to vector<8x128xf32>
    %16 = arith.mulf %15, %1 : vector<8x128xf32>
    %17 = math.sin %16 : vector<8x128xf32>
    %c9 = arith.constant 9 : index
    %c0_10 = arith.constant 0 : index
    %c0_11 = arith.constant 0 : index
    %18 = vector.load %arg2[%c9, %c0_10, %c0_11] : memref<27x8x128xf32, #tpu.memory_space<vmem>>, vector<1x8x128xf32>
    %19 = vector.shape_cast %18 : vector<1x8x128xf32> to vector<8x128xf32>
    %20 = vector.shape_cast %17 : vector<8x128xf32> to vector<1x8x128xf32>
    tpu.vector_store %arg2[%c9, %c0_10, %c0_11], %20 {strides = array<i32>} : memref<27x8x128xf32, #tpu.memory_space<vmem>>, vector<1x8x128xf32>,
    %21 = math.cos %16 : vector<8x128xf32>
    %c12 = arith.constant 12 : index
    %c0_12 = arith.constant 0 : index
    %c0_13 = arith.constant 0 : index
    %22 = vector.load %arg2[%c12, %c0_12, %c0_13] : memref<27x8x128xf32, #tpu.memory_space<vmem>>, vector<1x8x128xf32>
    %23 = vector.shape_cast %22 : vector<1x8x128xf32> to vector<8x128xf32>
    %24 = vector.shape_cast %21 : vector<8x128xf32> to vector<1x8x128xf32>
    tpu.vector_store %arg2[%c12, %c0_12, %c0_13], %24 {strides = array<i32>} : memref<27x8x128xf32, #tpu.memory_space<vmem>>, vector<1x8x128xf32>,
    %cst_14 = arith.constant 4.000000e+00 : f32
    %25 = vector.broadcast %cst_14 : f32 to vector<8x128xf32>
    %26 = arith.mulf %25, %1 : vector<8x128xf32>
    %27 = math.sin %26 : vector<8x128xf32>
    %c15 = arith.constant 15 : index
    %c0_15 = arith.constant 0 : index
    %c0_16 = arith.constant 0 : index
    %28 = vector.load %arg2[%c15, %c0_15, %c0_16] : memref<27x8x128xf32, #tpu.memory_space<vmem>>, vector<1x8x128xf32>
    %29 = vector.shape_cast %28 : vector<1x8x128xf32> to vector<8x128xf32>
    %30 = vector.shape_cast %27 : vector<8x128xf32> to vector<1x8x128xf32>
    tpu.vector_store %arg2[%c15, %c0_15, %c0_16], %30 {strides = array<i32>} : memref<27x8x128xf32, #tpu.memory_space<vmem>>, vector<1x8x128xf32>,
    %31 = math.cos %26 : vector<8x128xf32>
    %c18 = arith.constant 18 : index
    %c0_17 = arith.constant 0 : index
    %c0_18 = arith.constant 0 : index
    %32 = vector.load %arg2[%c18, %c0_17, %c0_18] : memref<27x8x128xf32, #tpu.memory_space<vmem>>, vector<1x8x128xf32>
    %33 = vector.shape_cast %32 : vector<1x8x128xf32> to vector<8x128xf32>
    %34 = vector.shape_cast %31 : vector<8x128xf32> to vector<1x8x128xf32>
    tpu.vector_store %arg2[%c18, %c0_17, %c0_18], %34 {strides = array<i32>} : memref<27x8x128xf32, #tpu.memory_space<vmem>>, vector<1x8x128xf32>,
    %cst_19 = arith.constant 8.000000e+00 : f32
    %35 = vector.broadcast %cst_19 : f32 to vector<8x128xf32>
    %36 = arith.mulf %35, %1 : vector<8x128xf32>
    %37 = math.sin %36 : vector<8x128xf32>
    %c21 = arith.constant 21 : index
    %c0_20 = arith.constant 0 : index
    %c0_21 = arith.constant 0 : index
    %38 = vector.load %arg2[%c21, %c0_20, %c0_21] : memref<27x8x128xf32, #tpu.memory_space<vmem>>, vector<1x8x128xf32>
    %39 = vector.shape_cast %38 : vector<1x8x128xf32> to vector<8x128xf32>
    %40 = vector.shape_cast %37 : vector<8x128xf32> to vector<1x8x128xf32>
    tpu.vector_store %arg2[%c21, %c0_20, %c0_21], %40 {strides = array<i32>} : memref<27x8x128xf32, #tpu.memory_space<vmem>>, vector<1x8x128xf32>,
    %41 = math.cos %36 : vector<8x128xf32>
    %c24 = arith.constant 24 : index
    %c0_22 = arith.constant 0 : index
    %c0_23 = arith.constant 0 : index
    %42 = vector.load %arg2[%c24, %c0_22, %c0_23] : memref<27x8x128xf32, #tpu.memory_space<vmem>>, vector<1x8x128xf32>
    %43 = vector.shape_cast %42 : vector<1x8x128xf32> to vector<8x128xf32>
    %44 = vector.shape_cast %41 : vector<8x128xf32> to vector<1x8x128xf32>
    tpu.vector_store %arg2[%c24, %c0_22, %c0_23], %44 {strides = array<i32>} : memref<27x8x128xf32, #tpu.memory_space<vmem>>, vector<1x8x128xf32>,
    %c1 = arith.constant 1 : index
    %c0_24 = arith.constant 0 : index
    %c0_25 = arith.constant 0 : index
    %45 = vector.load %arg1[%c1, %c0_24, %c0_25] : memref<3x8x128xf32, #tpu.memory_space<vmem>>, vector<1x8x128xf32>
    %46 = vector.shape_cast %45 : vector<1x8x128xf32> to vector<8x128xf32>
    %c1_26 = arith.constant 1 : index
    %c0_27 = arith.constant 0 : index
    %c0_28 = arith.constant 0 : index
    %47 = vector.load %arg2[%c1_26, %c0_27, %c0_28] : memref<27x8x128xf32, #tpu.memory_space<vmem>>, vector<1x8x128xf32>
    %48 = vector.shape_cast %47 : vector<1x8x128xf32> to vector<8x128xf32>
    %49 = vector.shape_cast %46 : vector<8x128xf32> to vector<1x8x128xf32>
    tpu.vector_store %arg2[%c1_26, %c0_27, %c0_28], %49 {strides = array<i32>} : memref<27x8x128xf32, #tpu.memory_space<vmem>>, vector<1x8x128xf32>,
    %cst_29 = arith.constant 1.000000e+00 : f32
    %50 = vector.broadcast %cst_29 : f32 to vector<8x128xf32>
    %51 = arith.mulf %50, %46 : vector<8x128xf32>
    %52 = math.sin %51 : vector<8x128xf32>
    %c4 = arith.constant 4 : index
    %c0_30 = arith.constant 0 : index
    %c0_31 = arith.constant 0 : index
    %53 = vector.load %arg2[%c4, %c0_30, %c0_31] : memref<27x8x128xf32, #tpu.memory_space<vmem>>, vector<1x8x128xf32>
    %54 = vector.shape_cast %53 : vector<1x8x128xf32> to vector<8x128xf32>
    %55 = vector.shape_cast %52 : vector<8x128xf32> to vector<1x8x128xf32>
    tpu.vector_store %arg2[%c4, %c0_30, %c0_31], %55 {strides = array<i32>} : memref<27x8x128xf32, #tpu.memory_space<vmem>>, vector<1x8x128xf32>,
    %56 = math.cos %51 : vector<8x128xf32>
    %c7 = arith.constant 7 : index
    %c0_32 = arith.constant 0 : index
    %c0_33 = arith.constant 0 : index
    %57 = vector.load %arg2[%c7, %c0_32, %c0_33] : memref<27x8x128xf32, #tpu.memory_space<vmem>>, vector<1x8x128xf32>
    %58 = vector.shape_cast %57 : vector<1x8x128xf32> to vector<8x128xf32>
    %59 = vector.shape_cast %56 : vector<8x128xf32> to vector<1x8x128xf32>
    tpu.vector_store %arg2[%c7, %c0_32, %c0_33], %59 {strides = array<i32>} : memref<27x8x128xf32, #tpu.memory_space<vmem>>, vector<1x8x128xf32>,
    %cst_34 = arith.constant 2.000000e+00 : f32
    %60 = vector.broadcast %cst_34 : f32 to vector<8x128xf32>
    %61 = arith.mulf %60, %46 : vector<8x128xf32>
    %62 = math.sin %61 : vector<8x128xf32>
    %c10 = arith.constant 10 : index
    %c0_35 = arith.constant 0 : index
    %c0_36 = arith.constant 0 : index
    %63 = vector.load %arg2[%c10, %c0_35, %c0_36] : memref<27x8x128xf32, #tpu.memory_space<vmem>>, vector<1x8x128xf32>
    %64 = vector.shape_cast %63 : vector<1x8x128xf32> to vector<8x128xf32>
    %65 = vector.shape_cast %62 : vector<8x128xf32> to vector<1x8x128xf32>
    tpu.vector_store %arg2[%c10, %c0_35, %c0_36], %65 {strides = array<i32>} : memref<27x8x128xf32, #tpu.memory_space<vmem>>, vector<1x8x128xf32>,
    %66 = math.cos %61 : vector<8x128xf32>
    %c13 = arith.constant 13 : index
    %c0_37 = arith.constant 0 : index
    %c0_38 = arith.constant 0 : index
    %67 = vector.load %arg2[%c13, %c0_37, %c0_38] : memref<27x8x128xf32, #tpu.memory_space<vmem>>, vector<1x8x128xf32>
    %68 = vector.shape_cast %67 : vector<1x8x128xf32> to vector<8x128xf32>
    %69 = vector.shape_cast %66 : vector<8x128xf32> to vector<1x8x128xf32>
    tpu.vector_store %arg2[%c13, %c0_37, %c0_38], %69 {strides = array<i32>} : memref<27x8x128xf32, #tpu.memory_space<vmem>>, vector<1x8x128xf32>,
    %cst_39 = arith.constant 4.000000e+00 : f32
    %70 = vector.broadcast %cst_39 : f32 to vector<8x128xf32>
    %71 = arith.mulf %70, %46 : vector<8x128xf32>
    %72 = math.sin %71 : vector<8x128xf32>
    %c16 = arith.constant 16 : index
    %c0_40 = arith.constant 0 : index
    %c0_41 = arith.constant 0 : index
    %73 = vector.load %arg2[%c16, %c0_40, %c0_41] : memref<27x8x128xf32, #tpu.memory_space<vmem>>, vector<1x8x128xf32>
    %74 = vector.shape_cast %73 : vector<1x8x128xf32> to vector<8x128xf32>
    %75 = vector.shape_cast %72 : vector<8x128xf32> to vector<1x8x128xf32>
    tpu.vector_store %arg2[%c16, %c0_40, %c0_41], %75 {strides = array<i32>} : memref<27x8x128xf32, #tpu.memory_space<vmem>>, vector<1x8x128xf32>,
    %76 = math.cos %71 : vector<8x128xf32>
    %c19 = arith.constant 19 : index
    %c0_42 = arith.constant 0 : index
    %c0_43 = arith.constant 0 : index
    %77 = vector.load %arg2[%c19, %c0_42, %c0_43] : memref<27x8x128xf32, #tpu.memory_space<vmem>>, vector<1x8x128xf32>
    %78 = vector.shape_cast %77 : vector<1x8x128xf32> to vector<8x128xf32>
    %79 = vector.shape_cast %76 : vector<8x128xf32> to vector<1x8x128xf32>
    tpu.vector_store %arg2[%c19, %c0_42, %c0_43], %79 {strides = array<i32>} : memref<27x8x128xf32, #tpu.memory_space<vmem>>, vector<1x8x128xf32>,
    %cst_44 = arith.constant 8.000000e+00 : f32
    %80 = vector.broadcast %cst_44 : f32 to vector<8x128xf32>
    %81 = arith.mulf %80, %46 : vector<8x128xf32>
    %82 = math.sin %81 : vector<8x128xf32>
    %c22 = arith.constant 22 : index
    %c0_45 = arith.constant 0 : index
    %c0_46 = arith.constant 0 : index
    %83 = vector.load %arg2[%c22, %c0_45, %c0_46] : memref<27x8x128xf32, #tpu.memory_space<vmem>>, vector<1x8x128xf32>
    %84 = vector.shape_cast %83 : vector<1x8x128xf32> to vector<8x128xf32>
    %85 = vector.shape_cast %82 : vector<8x128xf32> to vector<1x8x128xf32>
    tpu.vector_store %arg2[%c22, %c0_45, %c0_46], %85 {strides = array<i32>} : memref<27x8x128xf32, #tpu.memory_space<vmem>>, vector<1x8x128xf32>,
    %86 = math.cos %81 : vector<8x128xf32>
    %c25 = arith.constant 25 : index
    %c0_47 = arith.constant 0 : index
    %c0_48 = arith.constant 0 : index
    %87 = vector.load %arg2[%c25, %c0_47, %c0_48] : memref<27x8x128xf32, #tpu.memory_space<vmem>>, vector<1x8x128xf32>
    %88 = vector.shape_cast %87 : vector<1x8x128xf32> to vector<8x128xf32>
    %89 = vector.shape_cast %86 : vector<8x128xf32> to vector<1x8x128xf32>
    tpu.vector_store %arg2[%c25, %c0_47, %c0_48], %89 {strides = array<i32>} : memref<27x8x128xf32, #tpu.memory_space<vmem>>, vector<1x8x128xf32>,
    %c2 = arith.constant 2 : index
    %c0_49 = arith.constant 0 : index
    %c0_50 = arith.constant 0 : index
    %90 = vector.load %arg1[%c2, %c0_49, %c0_50] : memref<3x8x128xf32, #tpu.memory_space<vmem>>, vector<1x8x128xf32>
    %91 = vector.shape_cast %90 : vector<1x8x128xf32> to vector<8x128xf32>
    %c2_51 = arith.constant 2 : index
    %c0_52 = arith.constant 0 : index
    %c0_53 = arith.constant 0 : index
    %92 = vector.load %arg2[%c2_51, %c0_52, %c0_53] : memref<27x8x128xf32, #tpu.memory_space<vmem>>, vector<1x8x128xf32>
    %93 = vector.shape_cast %92 : vector<1x8x128xf32> to vector<8x128xf32>
    %94 = vector.shape_cast %91 : vector<8x128xf32> to vector<1x8x128xf32>
    tpu.vector_store %arg2[%c2_51, %c0_52, %c0_53], %94 {strides = array<i32>} : memref<27x8x128xf32, #tpu.memory_space<vmem>>, vector<1x8x128xf32>,
    %cst_54 = arith.constant 1.000000e+00 : f32
    %95 = vector.broadcast %cst_54 : f32 to vector<8x128xf32>
    %96 = arith.mulf %95, %91 : vector<8x128xf32>
    %97 = math.sin %96 : vector<8x128xf32>
    %c5 = arith.constant 5 : index
    %c0_55 = arith.constant 0 : index
    %c0_56 = arith.constant 0 : index
    %98 = vector.load %arg2[%c5, %c0_55, %c0_56] : memref<27x8x128xf32, #tpu.memory_space<vmem>>, vector<1x8x128xf32>
    %99 = vector.shape_cast %98 : vector<1x8x128xf32> to vector<8x128xf32>
    %100 = vector.shape_cast %97 : vector<8x128xf32> to vector<1x8x128xf32>
    tpu.vector_store %arg2[%c5, %c0_55, %c0_56], %100 {strides = array<i32>} : memref<27x8x128xf32, #tpu.memory_space<vmem>>, vector<1x8x128xf32>,
    %101 = math.cos %96 : vector<8x128xf32>
    %c8 = arith.constant 8 : index
    %c0_57 = arith.constant 0 : index
    %c0_58 = arith.constant 0 : index
    %102 = vector.load %arg2[%c8, %c0_57, %c0_58] : memref<27x8x128xf32, #tpu.memory_space<vmem>>, vector<1x8x128xf32>
    %103 = vector.shape_cast %102 : vector<1x8x128xf32> to vector<8x128xf32>
    %104 = vector.shape_cast %101 : vector<8x128xf32> to vector<1x8x128xf32>
    tpu.vector_store %arg2[%c8, %c0_57, %c0_58], %104 {strides = array<i32>} : memref<27x8x128xf32, #tpu.memory_space<vmem>>, vector<1x8x128xf32>,
    %cst_59 = arith.constant 2.000000e+00 : f32
    %105 = vector.broadcast %cst_59 : f32 to vector<8x128xf32>
    %106 = arith.mulf %105, %91 : vector<8x128xf32>
    %107 = math.sin %106 : vector<8x128xf32>
    %c11 = arith.constant 11 : index
    %c0_60 = arith.constant 0 : index
    %c0_61 = arith.constant 0 : index
    %108 = vector.load %arg2[%c11, %c0_60, %c0_61] : memref<27x8x128xf32, #tpu.memory_space<vmem>>, vector<1x8x128xf32>
    %109 = vector.shape_cast %108 : vector<1x8x128xf32> to vector<8x128xf32>
    %110 = vector.shape_cast %107 : vector<8x128xf32> to vector<1x8x128xf32>
    tpu.vector_store %arg2[%c11, %c0_60, %c0_61], %110 {strides = array<i32>} : memref<27x8x128xf32, #tpu.memory_space<vmem>>, vector<1x8x128xf32>,
    %111 = math.cos %106 : vector<8x128xf32>
    %c14 = arith.constant 14 : index
    %c0_62 = arith.constant 0 : index
    %c0_63 = arith.constant 0 : index
    %112 = vector.load %arg2[%c14, %c0_62, %c0_63] : memref<27x8x128xf32, #tpu.memory_space<vmem>>, vector<1x8x128xf32>
    %113 = vector.shape_cast %112 : vector<1x8x128xf32> to vector<8x128xf32>
    %114 = vector.shape_cast %111 : vector<8x128xf32> to vector<1x8x128xf32>
    tpu.vector_store %arg2[%c14, %c0_62, %c0_63], %114 {strides = array<i32>} : memref<27x8x128xf32, #tpu.memory_space<vmem>>, vector<1x8x128xf32>,
    %cst_64 = arith.constant 4.000000e+00 : f32
    %115 = vector.broadcast %cst_64 : f32 to vector<8x128xf32>
    %116 = arith.mulf %115, %91 : vector<8x128xf32>
    %117 = math.sin %116 : vector<8x128xf32>
    %c17 = arith.constant 17 : index
    %c0_65 = arith.constant 0 : index
    %c0_66 = arith.constant 0 : index
    %118 = vector.load %arg2[%c17, %c0_65, %c0_66] : memref<27x8x128xf32, #tpu.memory_space<vmem>>, vector<1x8x128xf32>
    %119 = vector.shape_cast %118 : vector<1x8x128xf32> to vector<8x128xf32>
    %120 = vector.shape_cast %117 : vector<8x128xf32> to vector<1x8x128xf32>
    tpu.vector_store %arg2[%c17, %c0_65, %c0_66], %120 {strides = array<i32>} : memref<27x8x128xf32, #tpu.memory_space<vmem>>, vector<1x8x128xf32>,
    %121 = math.cos %116 : vector<8x128xf32>
    %c20 = arith.constant 20 : index
    %c0_67 = arith.constant 0 : index
    %c0_68 = arith.constant 0 : index
    %122 = vector.load %arg2[%c20, %c0_67, %c0_68] : memref<27x8x128xf32, #tpu.memory_space<vmem>>, vector<1x8x128xf32>
    %123 = vector.shape_cast %122 : vector<1x8x128xf32> to vector<8x128xf32>
    %124 = vector.shape_cast %121 : vector<8x128xf32> to vector<1x8x128xf32>
    tpu.vector_store %arg2[%c20, %c0_67, %c0_68], %124 {strides = array<i32>} : memref<27x8x128xf32, #tpu.memory_space<vmem>>, vector<1x8x128xf32>,
    %cst_69 = arith.constant 8.000000e+00 : f32
    %125 = vector.broadcast %cst_69 : f32 to vector<8x128xf32>
    %126 = arith.mulf %125, %91 : vector<8x128xf32>
    %127 = math.sin %126 : vector<8x128xf32>
    %c23 = arith.constant 23 : index
    %c0_70 = arith.constant 0 : index
    %c0_71 = arith.constant 0 : index
    %128 = vector.load %arg2[%c23, %c0_70, %c0_71] : memref<27x8x128xf32, #tpu.memory_space<vmem>>, vector<1x8x128xf32>
    %129 = vector.shape_cast %128 : vector<1x8x128xf32> to vector<8x128xf32>
    %130 = vector.shape_cast %127 : vector<8x128xf32> to vector<1x8x128xf32>
    tpu.vector_store %arg2[%c23, %c0_70, %c0_71], %130 {strides = array<i32>} : memref<27x8x128xf32, #tpu.memory_space<vmem>>, vector<1x8x128xf32>,
    %131 = math.cos %126 : vector<8x128xf32>
    %c26 = arith.constant 26 : index
    %c0_72 = arith.constant 0 : index
    %c0_73 = arith.constant 0 : index
    %132 = vector.load %arg2[%c26, %c0_72, %c0_73] : memref<27x8x128xf32, #tpu.memory_space<vmem>>, vector<1x8x128xf32>
    %133 = vector.shape_cast %132 : vector<1x8x128xf32> to vector<8x128xf32>
    %134 = vector.shape_cast %131 : vector<8x128xf32> to vector<1x8x128xf32>
    tpu.vector_store %arg2[%c26, %c0_72, %c0_73], %134 {strides = array<i32>} : memref<27x8x128xf32, #tpu.memory_space<vmem>>, vector<1x8x128xf32>,
    return
  }
  func.func @transform_0(%arg0: i32) -> (i32, i32, i32) {
    %c0_i32 = arith.constant 0 : i32
    %c0_i32_0 = arith.constant 0 : i32
    %c0_i32_1 = arith.constant 0 : i32
    return %c0_i32, %arg0, %c0_i32_0 : i32, i32, i32
  }
  func.func @transform_1(%arg0: i32) -> (i32, i32, i32) {
    %c0_i32 = arith.constant 0 : i32
    %c0_i32_0 = arith.constant 0 : i32
    %c0_i32_1 = arith.constant 0 : i32
    return %c0_i32, %arg0, %c0_i32_0 : i32, i32, i32
  }
}

</mosaic_0001>

<llo_original>
// kernel: tpu_custom_call.1
$region0: #{tpu_custom_call.1}
  #allocation0 [shape = 'u32[]', space=smem, size = 0x4, offset = 0x4, fixed_abs, tag = 'smem constant byte address 0x4 - core index']
  #allocation1 [shape = 'u32[144,128]{1,0:T(1,128)}', space=vmem, size = 0x12000, scoped, tag = 'internal scratch']
  %s0 = inlined_call_operand.hbm [shape: f32[3,8,128], index: 0, kind: input, shape index: {}]
  %s1 = inlined_call_operand.hbm [shape: f32[27,8,128], index: 1, kind: output, shape index: {}]
  %s2 = sld [smem:[#allocation0]]
  $region18: #{tpu_custom_call.1} parent=0
    _
  %s4 = ssub.s32 1, %s2
  %s5 = scalar_select 0, %s4, %s2
  $region1: #{tpu_custom_call.1} parent=0
    #allocation2 [shape = 'u8[12288]{0}', space=vmem, size = 0x3000, scoped, tag = 'input window, operand 0, single buffered']
    #allocation3 [shape = 's32[1]{0}', space=sflag, size = 0x4, scoped, tag = 'scoped memory for tpu_custom_call.1']
    #allocation4 [shape = 's32[1]{0}', space=sflag, size = 0x4, scoped, tag = 'scoped memory for tpu_custom_call.1']
    #allocation5 [shape = 'u8[110592]{0}', space=vmem, size = 0x1b000, scoped, tag = 'output window, operand 0, single buffered']
    %6 = vsyncpa [#allocation3], 0
    %7 = vsyncpa [#allocation4], 0
    // Predicated region
    $region2: #{tpu_custom_call.1} parent=1 // pred_check
      _
    $region3: #{tpu_custom_call.1} parent=1 // pred_check_branch
      %9 = sbr.rel (0) target = $region5
    $region4: #{tpu_custom_call.1} parent=1 // pred_region
      %s11 = ssub.s32 384, 384
      %12 = vsyncadd [#allocation3], %s11
      %s13 = sshll.u32 [#allocation2], 4
      %s14 = int_to_ptr.vmem [resolvable:$true] %s13
      %19 = dma.hbm_to_vmem [thread:$0]  %s0, 384, %s14, [#allocation3], 128, 128, 8
    $region5: #{tpu_custom_call.1} parent=1 // pred_fallthru
      _
    // Predicated region
    $region6: #{tpu_custom_call.1} parent=1 // pred_check
      _
    $region7: #{tpu_custom_call.1} parent=1 // pred_check_branch
      %21 = sbr.rel (0) target = $region9
    $region8: #{tpu_custom_call.1} parent=1 // pred_region
      %22 = dma.done [#allocation3], 384
    $region9: #{tpu_custom_call.1} parent=1 // pred_fallthru
      _
    %v23 = vld [vmem:[#allocation2] sm:$0xff]
    %24 = vst [vmem:[#allocation5] sm:$0xff] %v23
    %v25 = vand.u32 2147483647, %v23
    %vm26 = vcmp.le.f32.partialorder %v25, 0.7853982
    %vm27 = vcmp.lt.s32.totalorder %v23, 0
    %v28 = vand.u32 %v23, 2139095040
    %v29 = vshrl.u32 %v28, 23
    %v30 = vsub.s32 %v29, 127
    %v31 = vand.u32 2147483647, %v23
    %v32 = vand.u32 %v31, 8388607
    %v33 = vor.u32 %v32, 8388608
    %v34 = vsub.s32 0, %v33
    %v35 = vadd.s32 %v30, 1
    %vm36 = vcmp.gt.s32.totalorder %v35, 0
    %v37 = vsel %vm36, %v35, 0
    %v38 = vshrl.u32 %v37, 5
    %v39 = vand.u32 %v37, 31
    %v40 = vsub.s32 32, %v39
    %v41 = vshrl.u32 683565275, %v40
    %v42 = vshll.u32 683565275, %v39
    %v43 = vshrl.u32 2475754826, %v40
    %v44 = vor.u32 %v42, %v43
    %v45 = vshll.u32 2475754826, %v39
    %v46 = vshrl.u32 2131351028, %v40
    %v47 = vor.u32 %v45, %v46
    %v48 = vshll.u32 2131351028, %v39
    %v49 = vshrl.u32 2102212464, %v40
    %v50 = vor.u32 %v48, %v49
    %v51 = vshll.u32 2102212464, %v39
    %v52 = vshrl.u32 920167782, %v40
    %v53 = vor.u32 %v51, %v52
    %v54 = vshll.u32 920167782, %v39
    %v55 = vshrl.u32 1326507024, %v40
    %v56 = vor.u32 %v54, %v55
    %vm57 = vcmp.lt.s32.totalorder %v38, 1
    %vm58 = vcmp.lt.s32.totalorder %v38, 2
    %vm59 = vcmp.lt.s32.totalorder %v38, 3
    %vm60 = vcmp.lt.s32.totalorder %v38, 4
    %v61 = vsel %vm57, %v41, %v44
    %v62 = vsel %vm60, %v50, 2102212464
    %v63 = vsel %vm59, %v47, %v62
    %v64 = vsel %vm58, %v61, %v63
    %v65 = vsel %vm57, %v44, %v47
    %v66 = vsel %vm60, %v53, 920167782
    %v67 = vsel %vm59, %v50, %v66
    %v68 = vsel %vm58, %v65, %v67
    %v69 = vsel %vm57, %v47, %v50
    %v70 = vsel %vm60, %v56, 1326507024
    %v71 = vsel %vm59, %v53, %v70
    %v72 = vsel %vm58, %v69, %v71
    %v73 = vshll.u32 %v33, 8
    %v74 = vmul.u32.u64.compose %v73, %v72
    %v75 = vextract.low.u32 %v74
    %v76 = vextract.high.u32 %v74
    %v77 = vmul.u32.u64.compose %v73, %v68
    %v78 = vextract.low.u32 %v77
    %v79 = vextract.high.u32 %v77
    %v80 = vmul.u32 %v73, %v64
    %v81 = vadd.s32 %v76, %v78
    %vm82 = vc.u32 %v76, %v78
    %v83 = vadd.s32 %v79, 1
    %v84 = vsel %vm82, %v83, %v79
    %v85 = vadd.s32 %v80, %v84
    %v86 = vadd.s32 %v85, 536870912
    %v87 = vshrl.u32 %v86, 30
    %v88 = vshll.u32 %v87, 30
    %v89 = vsub.s32 %v85, %v88
    %vm90 = vcmp.lt.s32.totalorder %v89, 0
    %v91 = vsub.s32 0, %v89
    %v92 = vsel %vm90, %v91, %v89
    %v93 = vclz %v92
    %v94 = vsub.s32 %v93, 2
    %vm95 = vcmp.gt.s32.totalorder 0, %v94
    %v96 = vsel %vm95, 0, %v94
    %v97 = vsub.s32 32, %v96
    %v98 = vshll.u32 %v89, %v96
    %v99 = vshrl.u32 %v81, %v97
    %v100 = vor.u32 %v98, %v99
    %v101 = vsub.s32 4294967266, %v96
    %v102 = vadd.s32 %v101, 127
    %v103 = vshll.u32 %v102, 23
    %v104 = vor.u32 4788187, %v103
    %v105 = vand.u32 2147483647, %v104
    %v107 = vcvt.s32.f32 %v100
    %v108 = vmul.f32 %v107, %v105
    %v109 = vxor.u32 %v108, 2147483648
    %v110 = vsel %vm27, %v109, %v108
    %v111 = vsub.s32 4, %v87
    %v112 = vsel %vm27, %v111, %v87
    %v113 = vsel %vm26, %v23, %v110
    %v114 = vsel %vm26, 0, %v112
    %v115 = vcosq.f32.pop %v113
    %v116 = vsinq.f32.pop %v113
    %vm117 = vweird.f32 %v23
    %v118 = vadd.s32 %v114, 3
    %v119 = vand.u32 %v118, 3
    %vm120 = vcmp.lt.s32.totalorder %v119, 2
    %vm121 = vcmp.eq.s32.totalorder %v119, 0
    %v122 = vxor.u32 %v116, 2147483648
    %v123 = vsel %vm121, %v115, %v122
    %vm124 = vcmp.eq.s32.totalorder %v119, 2
    %v125 = vxor.u32 %v115, 2147483648
    %v126 = vsel %vm124, %v125, %v116
    %v127 = vsel %vm120, %v123, %v126
    %v128 = vsel %vm117, nan, %v127
    %s129 = scalar_lea.vmem [#allocation5], 24
    %130 = vst [vmem:[%s129] sm:$0xff] %v128
    %v131 = vand.u32 2147483647, %v23
    %vm132 = vcmp.le.f32.partialorder %v131, 0.7853982
    %vm133 = vcmp.lt.s32.totalorder %v23, 0
    %v134 = vand.u32 %v23, 2139095040
    %v135 = vshrl.u32 %v134, 23
    %v136 = vsub.s32 %v135, 127
    %v137 = vand.u32 2147483647, %v23
    %v138 = vand.u32 %v137, 8388607
    %v139 = vor.u32 %v138, 8388608
    %v140 = vsub.s32 0, %v139
    %v141 = vadd.s32 %v136, 1
    %vm142 = vcmp.gt.s32.totalorder %v141, 0
    %v143 = vsel %vm142, %v141, 0
    %v144 = vshrl.u32 %v143, 5
    %v145 = vand.u32 %v143, 31
    %v146 = vsub.s32 32, %v145
    %v147 = vshrl.u32 683565275, %v146
    %v148 = vshll.u32 683565275, %v145
    %v149 = vshrl.u32 2475754826, %v146
    %v150 = vor.u32 %v148, %v149
    %v151 = vshll.u32 2475754826, %v145
    %v152 = vshrl.u32 2131351028, %v146
    %v153 = vor.u32 %v151, %v152
    %v154 = vshll.u32 2131351028, %v145
    %v155 = vshrl.u32 2102212464, %v146
    %v156 = vor.u32 %v154, %v155
    %v157 = vshll.u32 2102212464, %v145
    %v158 = vshrl.u32 920167782, %v146
    %v159 = vor.u32 %v157, %v158
    %v160 = vshll.u32 920167782, %v145
    %v161 = vshrl.u32 1326507024, %v146
    %v162 = vor.u32 %v160, %v161
    %vm163 = vcmp.lt.s32.totalorder %v144, 1
    %vm164 = vcmp.lt.s32.totalorder %v144, 2
    %vm165 = vcmp.lt.s32.totalorder %v144, 3
    %vm166 = vcmp.lt.s32.totalorder %v144, 4
    %v167 = vsel %vm163, %v147, %v150
    %v168 = vsel %vm166, %v156, 2102212464
    %v169 = vsel %vm165, %v153, %v168
    %v170 = vsel %vm164, %v167, %v169
    %v171 = vsel %vm163, %v150, %v153
    %v172 = vsel %vm166, %v159, 920167782
    %v173 = vsel %vm165, %v156, %v172
    %v174 = vsel %vm164, %v171, %v173
    %v175 = vsel %vm163, %v153, %v156
    %v176 = vsel %vm166, %v162, 1326507024
    %v177 = vsel %vm165, %v159, %v176
    %v178 = vsel %vm164, %v175, %v177
    %v179 = vshll.u32 %v139, 8
    %v180 = vmul.u32.u64.compose %v179, %v178
    %v181 = vextract.low.u32 %v180
    %v182 = vextract.high.u32 %v180
    %v183 = vmul.u32.u64.compose %v179, %v174
    %v184 = vextract.low.u32 %v183
    %v185 = vextract.high.u32 %v183
    %v186 = vmul.u32 %v179, %v170
    %v187 = vadd.s32 %v182, %v184
    %vm188 = vc.u32 %v182, %v184
    %v189 = vadd.s32 %v185, 1
    %v190 = vsel %vm188, %v189, %v185
    %v191 = vadd.s32 %v186, %v190
    %v192 = vadd.s32 %v191, 536870912
    %v193 = vshrl.u32 %v192, 30
    %v194 = vshll.u32 %v193, 30
    %v195 = vsub.s32 %v191, %v194
    %vm196 = vcmp.lt.s32.totalorder %v195, 0
    %v197 = vsub.s32 0, %v195
    %v198 = vsel %vm196, %v197, %v195
    %v199 = vclz %v198
    %v200 = vsub.s32 %v199, 2
    %vm201 = vcmp.gt.s32.totalorder 0, %v200
    %v202 = vsel %vm201, 0, %v200
    %v203 = vsub.s32 32, %v202
    %v204 = vshll.u32 %v195, %v202
    %v205 = vshrl.u32 %v187, %v203
    %v206 = vor.u32 %v204, %v205
    %v207 = vsub.s32 4294967266, %v202
    %v208 = vadd.s32 %v207, 127
    %v209 = vshll.u32 %v208, 23
    %v210 = vor.u32 4788187, %v209
    %v211 = vand.u32 2147483647, %v210
    %v213 = vcvt.s32.f32 %v206
    %v214 = vmul.f32 %v213, %v211
    %v215 = vxor.u32 %v214, 2147483648
    %v216 = vsel %vm133, %v215, %v214
    %v217 = vsub.s32 4, %v193
    %v218 = vsel %vm133, %v217, %v193
    %v219 = vsel %vm132, %v23, %v216
    %v220 = vsel %vm132, 0, %v218
    %v221 = vcosq.f32.pop %v219
    %v222 = vsinq.f32.pop %v219
    %vm223 = vweird.f32 %v23
    %v224 = vand.u32 %v220, 3
    %vm225 = vcmp.lt.s32.totalorder %v224, 2
    %vm226 = vcmp.eq.s32.totalorder %v224, 0
    %v227 = vxor.u32 %v222, 2147483648
    %v228 = vsel %vm226, %v221, %v227
    %vm229 = vcmp.eq.s32.totalorder %v224, 2
    %v230 = vxor.u32 %v221, 2147483648
    %v231 = vsel %vm229, %v230, %v222
    %v232 = vsel %vm225, %v228, %v231
    %v233 = vsel %vm223, nan, %v232
    %s234 = scalar_lea.vmem [#allocation5], 48
    %235 = vst [vmem:[%s234] sm:$0xff] %v233
    %v236 = vmul.f32 %v23, 2.0
    %v237 = vand.u32 2147483647, %v236
    %vm238 = vcmp.le.f32.partialorder %v237, 0.7853982
    %vm239 = vcmp.lt.s32.totalorder %v236, 0
    %v240 = vand.u32 %v236, 2139095040
    %v241 = vshrl.u32 %v240, 23
    %v242 = vsub.s32 %v241, 127
    %v243 = vand.u32 2147483647, %v236
    %v244 = vand.u32 %v243, 8388607
    %v245 = vor.u32 %v244, 8388608
    %v246 = vsub.s32 0, %v245
    %v247 = vadd.s32 %v242, 1
    %vm248 = vcmp.gt.s32.totalorder %v247, 0
    %v249 = vsel %vm248, %v247, 0
    %v250 = vshrl.u32 %v249, 5
    %v251 = vand.u32 %v249, 31
    %v252 = vsub.s32 32, %v251
    %v253 = vshrl.u32 683565275, %v252
    %v254 = vshll.u32 683565275, %v251
    %v255 = vshrl.u32 2475754826, %v252
    %v256 = vor.u32 %v254, %v255
    %v257 = vshll.u32 2475754826, %v251
    %v258 = vshrl.u32 2131351028, %v252
    %v259 = vor.u32 %v257, %v258
    %v260 = vshll.u32 2131351028, %v251
    %v261 = vshrl.u32 2102212464, %v252
    %v262 = vor.u32 %v260, %v261
    %v263 = vshll.u32 2102212464, %v251
    %v264 = vshrl.u32 920167782, %v252
    %v265 = vor.u32 %v263, %v264
    %v266 = vshll.u32 920167782, %v251
    %v267 = vshrl.u32 1326507024, %v252
    %v268 = vor.u32 %v266, %v267
    %vm269 = vcmp.lt.s32.totalorder %v250, 1
    %vm270 = vcmp.lt.s32.totalorder %v250, 2
    %vm271 = vcmp.lt.s32.totalorder %v250, 3
    %vm272 = vcmp.lt.s32.totalorder %v250, 4
    %v273 = vsel %vm269, %v253, %v256
    %v274 = vsel %vm272, %v262, 2102212464
    %v275 = vsel %vm271, %v259, %v274
    %v276 = vsel %vm270, %v273, %v275
    %v277 = vsel %vm269, %v256, %v259
    %v278 = vsel %vm272, %v265, 920167782
    %v279 = vsel %vm271, %v262, %v278
    %v280 = vsel %vm270, %v277, %v279
    %v281 = vsel %vm269, %v259, %v262
    %v282 = vsel %vm272, %v268, 1326507024
    %v283 = vsel %vm271, %v265, %v282
    %v284 = vsel %vm270, %v281, %v283
    %v285 = vshll.u32 %v245, 8
    %v286 = vmul.u32.u64.compose %v285, %v284
    %v287 = vextract.low.u32 %v286
    %v288 = vextract.high.u32 %v286
    %v289 = vmul.u32.u64.compose %v285, %v280
    %v290 = vextract.low.u32 %v289
    %v291 = vextract.high.u32 %v289
    %v292 = vmul.u32 %v285, %v276
    %v293 = vadd.s32 %v288, %v290
    %vm294 = vc.u32 %v288, %v290
    %v295 = vadd.s32 %v291, 1
    %v296 = vsel %vm294, %v295, %v291
    %v297 = vadd.s32 %v292, %v296
    %v298 = vadd.s32 %v297, 536870912
    %v299 = vshrl.u32 %v298, 30
    %v300 = vshll.u32 %v299, 30
    %v301 = vsub.s32 %v297, %v300
    %vm302 = vcmp.lt.s32.totalorder %v301, 0
    %v303 = vsub.s32 0, %v301
    %v304 = vsel %vm302, %v303, %v301
    %v305 = vclz %v304
    %v306 = vsub.s32 %v305, 2
    %vm307 = vcmp.gt.s32.totalorder 0, %v306
    %v308 = vsel %vm307, 0, %v306
    %v309 = vsub.s32 32, %v308
    %v310 = vshll.u32 %v301, %v308
    %v311 = vshrl.u32 %v293, %v309
    %v312 = vor.u32 %v310, %v311
    %v313 = vsub.s32 4294967266, %v308
    %v314 = vadd.s32 %v313, 127
    %v315 = vshll.u32 %v314, 23
    %v316 = vor.u32 4788187, %v315
    %v317 = vand.u32 2147483647, %v316
    %v319 = vcvt.s32.f32 %v312
    %v320 = vmul.f32 %v319, %v317
    %v321 = vxor.u32 %v320, 2147483648
    %v322 = vsel %vm239, %v321, %v320
    %v323 = vsub.s32 4, %v299
    %v324 = vsel %vm239, %v323, %v299
    %v325 = vsel %vm238, %v236, %v322
    %v326 = vsel %vm238, 0, %v324
    %v327 = vcosq.f32.pop %v325
    %v328 = vsinq.f32.pop %v325
    %vm329 = vweird.f32 %v236
    %v330 = vadd.s32 %v326, 3
    %v331 = vand.u32 %v330, 3
    %vm332 = vcmp.lt.s32.totalorder %v331, 2
    %vm333 = vcmp.eq.s32.totalorder %v331, 0
    %v334 = vxor.u32 %v328, 2147483648
    %v335 = vsel %vm333, %v327, %v334
    %vm336 = vcmp.eq.s32.totalorder %v331, 2
    %v337 = vxor.u32 %v327, 2147483648
    %v338 = vsel %vm336, %v337, %v328
    %v339 = vsel %vm332, %v335, %v338
    %v340 = vsel %vm329, nan, %v339
    %s341 = scalar_lea.vmem [#allocation5], 72
    %342 = vst [vmem:[%s341] sm:$0xff] %v340
    %v343 = vand.u32 2147483647, %v236
    %vm344 = vcmp.le.f32.partialorder %v343, 0.7853982
    %vm345 = vcmp.lt.s32.totalorder %v236, 0
    %v346 = vand.u32 %v236, 2139095040
    %v347 = vshrl.u32 %v346, 23
    %v348 = vsub.s32 %v347, 127
    %v349 = vand.u32 2147483647, %v236
    %v350 = vand.u32 %v349, 8388607
    %v351 = vor.u32 %v350, 8388608
    %v352 = vsub.s32 0, %v351
    %v353 = vadd.s32 %v348, 1
    %vm354 = vcmp.gt.s32.totalorder %v353, 0
    %v355 = vsel %vm354, %v353, 0
    %v356 = vshrl.u32 %v355, 5
    %v357 = vand.u32 %v355, 31
    %v358 = vsub.s32 32, %v357
    %v359 = vshrl.u32 683565275, %v358
    %v360 = vshll.u32 683565275, %v357
    %v361 = vshrl.u32 2475754826, %v358
    %v362 = vor.u32 %v360, %v361
    %v363 = vshll.u32 2475754826, %v357
    %v364 = vshrl.u32 2131351028, %v358
    %v365 = vor.u32 %v363, %v364
    %v366 = vshll.u32 2131351028, %v357
    %v367 = vshrl.u32 2102212464, %v358
    %v368 = vor.u32 %v366, %v367
    %v369 = vshll.u32 2102212464, %v357
    %v370 = vshrl.u32 920167782, %v358
    %v371 = vor.u32 %v369, %v370
    %v372 = vshll.u32 920167782, %v357
    %v373 = vshrl.u32 1326507024, %v358
    %v374 = vor.u32 %v372, %v373
    %vm375 = vcmp.lt.s32.totalorder %v356, 1
    %vm376 = vcmp.lt.s32.totalorder %v356, 2
    %vm377 = vcmp.lt.s32.totalorder %v356, 3
    %vm378 = vcmp.lt.s32.totalorder %v356, 4
    %v379 = vsel %vm375, %v359, %v362
    %v380 = vsel %vm378, %v368, 2102212464
    %v381 = vsel %vm377, %v365, %v380
    %v382 = vsel %vm376, %v379, %v381
    %v383 = vsel %vm375, %v362, %v365
    %v384 = vsel %vm378, %v371, 920167782
    %v385 = vsel %vm377, %v368, %v384
    %v386 = vsel %vm376, %v383, %v385
    %v387 = vsel %vm375, %v365, %v368
    %v388 = vsel %vm378, %v374, 1326507024
    %v389 = vsel %vm377, %v371, %v388
    %v390 = vsel %vm376, %v387, %v389
    %v391 = vshll.u32 %v351, 8
    %v392 = vmul.u32.u64.compose %v391, %v390
    %v393 = vextract.low.u32 %v392
    %v394 = vextract.high.u32 %v392
    %v395 = vmul.u32.u64.compose %v391, %v386
    %v396 = vextract.low.u32 %v395
    %v397 = vextract.high.u32 %v395
    %v398 = vmul.u32 %v391, %v382
    %v399 = vadd.s32 %v394, %v396
    %vm400 = vc.u32 %v394, %v396
    %v401 = vadd.s32 %v397, 1
    %v402 = vsel %vm400, %v401, %v397
    %v403 = vadd.s32 %v398, %v402
    %v404 = vadd.s32 %v403, 536870912
    %v405 = vshrl.u32 %v404, 30
    %v406 = vshll.u32 %v405, 30
    %v407 = vsub.s32 %v403, %v406
    %vm408 = vcmp.lt.s32.totalorder %v407, 0
    %v409 = vsub.s32 0, %v407
    %v410 = vsel %vm408, %v409, %v407
    %v411 = vclz %v410
    %v412 = vsub.s32 %v411, 2
    %vm413 = vcmp.gt.s32.totalorder 0, %v412
    %v414 = vsel %vm413, 0, %v412
    %v415 = vsub.s32 32, %v414
    %v416 = vshll.u32 %v407, %v414
    %v417 = vshrl.u32 %v399, %v415
    %v418 = vor.u32 %v416, %v417
    %v419 = vsub.s32 4294967266, %v414
    %v420 = vadd.s32 %v419, 127
    %v421 = vshll.u32 %v420, 23
    %v422 = vor.u32 4788187, %v421
    %v423 = vand.u32 2147483647, %v422
    %v425 = vcvt.s32.f32 %v418
    %v426 = vmul.f32 %v425, %v423
    %v427 = vxor.u32 %v426, 2147483648
    %v428 = vsel %vm345, %v427, %v426
    %v429 = vsub.s32 4, %v405
    %v430 = vsel %vm345, %v429, %v405
    %v431 = vsel %vm344, %v236, %v428
    %v432 = vsel %vm344, 0, %v430
    %v433 = vcosq.f32.pop %v431
    %v434 = vsinq.f32.pop %v431
    %vm435 = vweird.f32 %v236
    %v436 = vand.u32 %v432, 3
    %vm437 = vcmp.lt.s32.totalorder %v436, 2
    %vm438 = vcmp.eq.s32.totalorder %v436, 0
    %v439 = vxor.u32 %v434, 2147483648
    %v440 = vsel %vm438, %v433, %v439
    %vm441 = vcmp.eq.s32.totalorder %v436, 2
    %v442 = vxor.u32 %v433, 2147483648
    %v443 = vsel %vm441, %v442, %v434
    %v444 = vsel %vm437, %v440, %v443
    %v445 = vsel %vm435, nan, %v444
    %s446 = scalar_lea.vmem [#allocation5], 96
    %447 = vst [vmem:[%s446] sm:$0xff] %v445
    %v448 = vmul.f32 %v23, 4.0
    %v449 = vand.u32 2147483647, %v448
    %vm450 = vcmp.le.f32.partialorder %v449, 0.7853982
    %vm451 = vcmp.lt.s32.totalorder %v448, 0
    %v452 = vand.u32 %v448, 2139095040
    %v453 = vshrl.u32 %v452, 23
    %v454 = vsub.s32 %v453, 127
    %v455 = vand.u32 2147483647, %v448
    %v456 = vand.u32 %v455, 8388607
    %v457 = vor.u32 %v456, 8388608
    %v458 = vsub.s32 0, %v457
    %v459 = vadd.s32 %v454, 1
    %vm460 = vcmp.gt.s32.totalorder %v459, 0
    %v461 = vsel %vm460, %v459, 0
    %v462 = vshrl.u32 %v461, 5
    %v463 = vand.u32 %v461, 31
    %v464 = vsub.s32 32, %v463
    %v465 = vshrl.u32 683565275, %v464
    %v466 = vshll.u32 683565275, %v463
    %v467 = vshrl.u32 2475754826, %v464
    %v468 = vor.u32 %v466, %v467
    %v469 = vshll.u32 2475754826, %v463
    %v470 = vshrl.u32 2131351028, %v464
    %v471 = vor.u32 %v469, %v470
    %v472 = vshll.u32 2131351028, %v463
    %v473 = vshrl.u32 2102212464, %v464
    %v474 = vor.u32 %v472, %v473
    %v475 = vshll.u32 2102212464, %v463
    %v476 = vshrl.u32 920167782, %v464
    %v477 = vor.u32 %v475, %v476
    %v478 = vshll.u32 920167782, %v463
    %v479 = vshrl.u32 1326507024, %v464
    %v480 = vor.u32 %v478, %v479
    %vm481 = vcmp.lt.s32.totalorder %v462, 1
    %vm482 = vcmp.lt.s32.totalorder %v462, 2
    %vm483 = vcmp.lt.s32.totalorder %v462, 3
    %vm484 = vcmp.lt.s32.totalorder %v462, 4
    %v485 = vsel %vm481, %v465, %v468
    %v486 = vsel %vm484, %v474, 2102212464
    %v487 = vsel %vm483, %v471, %v486
    %v488 = vsel %vm482, %v485, %v487
    %v489 = vsel %vm481, %v468, %v471
    %v490 = vsel %vm484, %v477, 920167782
    %v491 = vsel %vm483, %v474, %v490
    %v492 = vsel %vm482, %v489, %v491
    %v493 = vsel %vm481, %v471, %v474
    %v494 = vsel %vm484, %v480, 1326507024
    %v495 = vsel %vm483, %v477, %v494
    %v496 = vsel %vm482, %v493, %v495
    %v497 = vshll.u32 %v457, 8
    %v498 = vmul.u32.u64.compose %v497, %v496
    %v499 = vextract.low.u32 %v498
    %v500 = vextract.high.u32 %v498
    %v501 = vmul.u32.u64.compose %v497, %v492
    %v502 = vextract.low.u32 %v501
    %v503 = vextract.high.u32 %v501
    %v504 = vmul.u32 %v497, %v488
    %v505 = vadd.s32 %v500, %v502
    %vm506 = vc.u32 %v500, %v502
    %v507 = vadd.s32 %v503, 1
    %v508 = vsel %vm506, %v507, %v503
    %v509 = vadd.s32 %v504, %v508
    %v510 = vadd.s32 %v509, 536870912
    %v511 = vshrl.u32 %v510, 30
    %v512 = vshll.u32 %v511, 30
    %v513 = vsub.s32 %v509, %v512
    %vm514 = vcmp.lt.s32.totalorder %v513, 0
    %v515 = vsub.s32 0, %v513
    %v516 = vsel %vm514, %v515, %v513
    %v517 = vclz %v516
    %v518 = vsub.s32 %v517, 2
    %vm519 = vcmp.gt.s32.totalorder 0, %v518
    %v520 = vsel %vm519, 0, %v518
    %v521 = vsub.s32 32, %v520
    %v522 = vshll.u32 %v513, %v520
    %v523 = vshrl.u32 %v505, %v521
    %v524 = vor.u32 %v522, %v523
    %v525 = vsub.s32 4294967266, %v520
    %v526 = vadd.s32 %v525, 127
    %v527 = vshll.u32 %v526, 23
    %v528 = vor.u32 4788187, %v527
    %v529 = vand.u32 2147483647, %v528
    %v531 = vcvt.s32.f32 %v524
    %v532 = vmul.f32 %v531, %v529
    %v533 = vxor.u32 %v532, 2147483648
    %v534 = vsel %vm451, %v533, %v532
    %v535 = vsub.s32 4, %v511
    %v536 = vsel %vm451, %v535, %v511
    %v537 = vsel %vm450, %v448, %v534
    %v538 = vsel %vm450, 0, %v536
    %v539 = vcosq.f32.pop %v537
    %v540 = vsinq.f32.pop %v537
    %vm541 = vweird.f32 %v448
    %v542 = vadd.s32 %v538, 3
    %v543 = vand.u32 %v542, 3
    %vm544 = vcmp.lt.s32.totalorder %v543, 2
    %vm545 = vcmp.eq.s32.totalorder %v543, 0
    %v546 = vxor.u32 %v540, 2147483648
    %v547 = vsel %vm545, %v539, %v546
    %vm548 = vcmp.eq.s32.totalorder %v543, 2
    %v549 = vxor.u32 %v539, 2147483648
    %v550 = vsel %vm548, %v549, %v540
    %v551 = vsel %vm544, %v547, %v550
    %v552 = vsel %vm541, nan, %v551
    %s553 = scalar_lea.vmem [#allocation5], 120
    %554 = vst [vmem:[%s553] sm:$0xff] %v552
    %v555 = vand.u32 2147483647, %v448
    %vm556 = vcmp.le.f32.partialorder %v555, 0.7853982
    %vm557 = vcmp.lt.s32.totalorder %v448, 0
    %v558 = vand.u32 %v448, 2139095040
    %v559 = vshrl.u32 %v558, 23
    %v560 = vsub.s32 %v559, 127
    %v561 = vand.u32 2147483647, %v448
    %v562 = vand.u32 %v561, 8388607
    %v563 = vor.u32 %v562, 8388608
    %v564 = vsub.s32 0, %v563
    %v565 = vadd.s32 %v560, 1
    %vm566 = vcmp.gt.s32.totalorder %v565, 0
    %v567 = vsel %vm566, %v565, 0
    %v568 = vshrl.u32 %v567, 5
    %v569 = vand.u32 %v567, 31
    %v570 = vsub.s32 32, %v569
    %v571 = vshrl.u32 683565275, %v570
    %v572 = vshll.u32 683565275, %v569
    %v573 = vshrl.u32 2475754826, %v570
    %v574 = vor.u32 %v572, %v573
    %v575 = vshll.u32 2475754826, %v569
    %v576 = vshrl.u32 2131351028, %v570
    %v577 = vor.u32 %v575, %v576
    %v578 = vshll.u32 2131351028, %v569
    %v579 = vshrl.u32 2102212464, %v570
    %v580 = vor.u32 %v578, %v579
    %v581 = vshll.u32 2102212464, %v569
    %v582 = vshrl.u32 920167782, %v570
    %v583 = vor.u32 %v581, %v582
    %v584 = vshll.u32 920167782, %v569
    %v585 = vshrl.u32 1326507024, %v570
    %v586 = vor.u32 %v584, %v585
    %vm587 = vcmp.lt.s32.totalorder %v568, 1
    %vm588 = vcmp.lt.s32.totalorder %v568, 2
    %vm589 = vcmp.lt.s32.totalorder %v568, 3
    %vm590 = vcmp.lt.s32.totalorder %v568, 4
    %v591 = vsel %vm587, %v571, %v574
    %v592 = vsel %vm590, %v580, 2102212464
    %v593 = vsel %vm589, %v577, %v592
    %v594 = vsel %vm588, %v591, %v593
    %v595 = vsel %vm587, %v574, %v577
    %v596 = vsel %vm590, %v583, 920167782
    %v597 = vsel %vm589, %v580, %v596
    %v598 = vsel %vm588, %v595, %v597
    %v599 = vsel %vm587, %v577, %v580
    %v600 = vsel %vm590, %v586, 1326507024
    %v601 = vsel %vm589, %v583, %v600
    %v602 = vsel %vm588, %v599, %v601
    %v603 = vshll.u32 %v563, 8
    %v604 = vmul.u32.u64.compose %v603, %v602
    %v605 = vextract.low.u32 %v604
    %v606 = vextract.high.u32 %v604
    %v607 = vmul.u32.u64.compose %v603, %v598
    %v608 = vextract.low.u32 %v607
    %v609 = vextract.high.u32 %v607
    %v610 = vmul.u32 %v603, %v594
    %v611 = vadd.s32 %v606, %v608
    %vm612 = vc.u32 %v606, %v608
    %v613 = vadd.s32 %v609, 1
    %v614 = vsel %vm612, %v613, %v609
    %v615 = vadd.s32 %v610, %v614
    %v616 = vadd.s32 %v615, 536870912
    %v617 = vshrl.u32 %v616, 30
    %v618 = vshll.u32 %v617, 30
    %v619 = vsub.s32 %v615, %v618
    %vm620 = vcmp.lt.s32.totalorder %v619, 0
    %v621 = vsub.s32 0, %v619
    %v622 = vsel %vm620, %v621, %v619
    %v623 = vclz %v622
    %v624 = vsub.s32 %v623, 2
    %vm625 = vcmp.gt.s32.totalorder 0, %v624
    %v626 = vsel %vm625, 0, %v624
    %v627 = vsub.s32 32, %v626
    %v628 = vshll.u32 %v619, %v626
    %v629 = vshrl.u32 %v611, %v627
    %v630 = vor.u32 %v628, %v629
    %v631 = vsub.s32 4294967266, %v626
    %v632 = vadd.s32 %v631, 127
    %v633 = vshll.u32 %v632, 23
    %v634 = vor.u32 4788187, %v633
    %v635 = vand.u32 2147483647, %v634
    %v637 = vcvt.s32.f32 %v630
    %v638 = vmul.f32 %v637, %v635
    %v639 = vxor.u32 %v638, 2147483648
    %v640 = vsel %vm557, %v639, %v638
    %v641 = vsub.s32 4, %v617
    %v642 = vsel %vm557, %v641, %v617
    %v643 = vsel %vm556, %v448, %v640
    %v644 = vsel %vm556, 0, %v642
    %v645 = vcosq.f32.pop %v643
    %v646 = vsinq.f32.pop %v643
    %vm647 = vweird.f32 %v448
    %v648 = vand.u32 %v644, 3
    %vm649 = vcmp.lt.s32.totalorder %v648, 2
    %vm650 = vcmp.eq.s32.totalorder %v648, 0
    %v651 = vxor.u32 %v646, 2147483648
    %v652 = vsel %vm650, %v645, %v651
    %vm653 = vcmp.eq.s32.totalorder %v648, 2
    %v654 = vxor.u32 %v645, 2147483648
    %v655 = vsel %vm653, %v654, %v646
    %v656 = vsel %vm649, %v652, %v655
    %v657 = vsel %vm647, nan, %v656
    %s658 = scalar_lea.vmem [#allocation5], 144
    %659 = vst [vmem:[%s658] sm:$0xff] %v657
    %v660 = vmul.f32 %v23, 8.0
    %v661 = vand.u32 2147483647, %v660
    %vm662 = vcmp.le.f32.partialorder %v661, 0.7853982
    %vm663 = vcmp.lt.s32.totalorder %v660, 0
    %v664 = vand.u32 %v660, 2139095040
    %v665 = vshrl.u32 %v664, 23
    %v666 = vsub.s32 %v665, 127
    %v667 = vand.u32 2147483647, %v660
    %v668 = vand.u32 %v667, 8388607
    %v669 = vor.u32 %v668, 8388608
    %v670 = vsub.s32 0, %v669
    %v671 = vadd.s32 %v666, 1
    %vm672 = vcmp.gt.s32.totalorder %v671, 0
    %v673 = vsel %vm672, %v671, 0
    %v674 = vshrl.u32 %v673, 5
    %v675 = vand.u32 %v673, 31
    %v676 = vsub.s32 32, %v675
    %v677 = vshrl.u32 683565275, %v676
    %v678 = vshll.u32 683565275, %v675
    %v679 = vshrl.u32 2475754826, %v676
    %v680 = vor.u32 %v678, %v679
    %v681 = vshll.u32 2475754826, %v675
    %v682 = vshrl.u32 2131351028, %v676
    %v683 = vor.u32 %v681, %v682
    %v684 = vshll.u32 2131351028, %v675
    %v685 = vshrl.u32 2102212464, %v676
    %v686 = vor.u32 %v684, %v685
    %v687 = vshll.u32 2102212464, %v675
    %v688 = vshrl.u32 920167782, %v676
    %v689 = vor.u32 %v687, %v688
    %v690 = vshll.u32 920167782, %v675
    %v691 = vshrl.u32 1326507024, %v676
    %v692 = vor.u32 %v690, %v691
    %vm693 = vcmp.lt.s32.totalorder %v674, 1
    %vm694 = vcmp.lt.s32.totalorder %v674, 2
    %vm695 = vcmp.lt.s32.totalorder %v674, 3
    %vm696 = vcmp.lt.s32.totalorder %v674, 4
    %v697 = vsel %vm693, %v677, %v680
    %v698 = vsel %vm696, %v686, 2102212464
    %v699 = vsel %vm695, %v683, %v698
    %v700 = vsel %vm694, %v697, %v699
    %v701 = vsel %vm693, %v680, %v683
    %v702 = vsel %vm696, %v689, 920167782
    %v703 = vsel %vm695, %v686, %v702
    %v704 = vsel %vm694, %v701, %v703
    %v705 = vsel %vm693, %v683, %v686
    %v706 = vsel %vm696, %v692, 1326507024
    %v707 = vsel %vm695, %v689, %v706
    %v708 = vsel %vm694, %v705, %v707
    %v709 = vshll.u32 %v669, 8
    %v710 = vmul.u32.u64.compose %v709, %v708
    %v711 = vextract.low.u32 %v710
    %v712 = vextract.high.u32 %v710
    %v713 = vmul.u32.u64.compose %v709, %v704
    %v714 = vextract.low.u32 %v713
    %v715 = vextract.high.u32 %v713
    %v716 = vmul.u32 %v709, %v700
    %v717 = vadd.s32 %v712, %v714
    %vm718 = vc.u32 %v712, %v714
    %v719 = vadd.s32 %v715, 1
    %v720 = vsel %vm718, %v719, %v715
    %v721 = vadd.s32 %v716, %v720
    %v722 = vadd.s32 %v721, 536870912
    %v723 = vshrl.u32 %v722, 30
    %v724 = vshll.u32 %v723, 30
    %v725 = vsub.s32 %v721, %v724
    %vm726 = vcmp.lt.s32.totalorder %v725, 0
    %v727 = vsub.s32 0, %v725
    %v728 = vsel %vm726, %v727, %v725
    %v729 = vclz %v728
    %v730 = vsub.s32 %v729, 2
    %vm731 = vcmp.gt.s32.totalorder 0, %v730
    %v732 = vsel %vm731, 0, %v730
    %v733 = vsub.s32 32, %v732
    %v734 = vshll.u32 %v725, %v732
    %v735 = vshrl.u32 %v717, %v733
    %v736 = vor.u32 %v734, %v735
    %v737 = vsub.s32 4294967266, %v732
    %v738 = vadd.s32 %v737, 127
    %v739 = vshll.u32 %v738, 23
    %v740 = vor.u32 4788187, %v739
    %v741 = vand.u32 2147483647, %v740
    %v743 = vcvt.s32.f32 %v736
    %v744 = vmul.f32 %v743, %v741
    %v745 = vxor.u32 %v744, 2147483648
    %v746 = vsel %vm663, %v745, %v744
    %v747 = vsub.s32 4, %v723
    %v748 = vsel %vm663, %v747, %v723
    %v749 = vsel %vm662, %v660, %v746
    %v750 = vsel %vm662, 0, %v748
    %v751 = vcosq.f32.pop %v749
    %v752 = vsinq.f32.pop %v749
    %vm753 = vweird.f32 %v660
    %v754 = vadd.s32 %v750, 3
    %v755 = vand.u32 %v754, 3
    %vm756 = vcmp.lt.s32.totalorder %v755, 2
    %vm757 = vcmp.eq.s32.totalorder %v755, 0
    %v758 = vxor.u32 %v752, 2147483648
    %v759 = vsel %vm757, %v751, %v758
    %vm760 = vcmp.eq.s32.totalorder %v755, 2
    %v761 = vxor.u32 %v751, 2147483648
    %v762 = vsel %vm760, %v761, %v752
    %v763 = vsel %vm756, %v759, %v762
    %v764 = vsel %vm753, nan, %v763
    %s765 = scalar_lea.vmem [#allocation5], 168
    %766 = vst [vmem:[%s765] sm:$0xff] %v764
    %v767 = vand.u32 2147483647, %v660
    %vm768 = vcmp.le.f32.partialorder %v767, 0.7853982
    %vm769 = vcmp.lt.s32.totalorder %v660, 0
    %v770 = vand.u32 %v660, 2139095040
    %v771 = vshrl.u32 %v770, 23
    %v772 = vsub.s32 %v771, 127
    %v773 = vand.u32 2147483647, %v660
    %v774 = vand.u32 %v773, 8388607
    %v775 = vor.u32 %v774, 8388608
    %v776 = vsub.s32 0, %v775
    %v777 = vadd.s32 %v772, 1
    %vm778 = vcmp.gt.s32.totalorder %v777, 0
    %v779 = vsel %vm778, %v777, 0
    %v780 = vshrl.u32 %v779, 5
    %v781 = vand.u32 %v779, 31
    %v782 = vsub.s32 32, %v781
    %v783 = vshrl.u32 683565275, %v782
    %v784 = vshll.u32 683565275, %v781
    %v785 = vshrl.u32 2475754826, %v782
    %v786 = vor.u32 %v784, %v785
    %v787 = vshll.u32 2475754826, %v781
    %v788 = vshrl.u32 2131351028, %v782
    %v789 = vor.u32 %v787, %v788
    %v790 = vshll.u32 2131351028, %v781
    %v791 = vshrl.u32 2102212464, %v782
    %v792 = vor.u32 %v790, %v791
    %v793 = vshll.u32 2102212464, %v781
    %v794 = vshrl.u32 920167782, %v782
    %v795 = vor.u32 %v793, %v794
    %v796 = vshll.u32 920167782, %v781
    %v797 = vshrl.u32 1326507024, %v782
    %v798 = vor.u32 %v796, %v797
    %vm799 = vcmp.lt.s32.totalorder %v780, 1
    %vm800 = vcmp.lt.s32.totalorder %v780, 2
    %vm801 = vcmp.lt.s32.totalorder %v780, 3
    %vm802 = vcmp.lt.s32.totalorder %v780, 4
    %v803 = vsel %vm799, %v783, %v786
    %v804 = vsel %vm802, %v792, 2102212464
    %v805 = vsel %vm801, %v789, %v804
    %v806 = vsel %vm800, %v803, %v805
    %v807 = vsel %vm799, %v786, %v789
    %v808 = vsel %vm802, %v795, 920167782
    %v809 = vsel %vm801, %v792, %v808
    %v810 = vsel %vm800, %v807, %v809
    %v811 = vsel %vm799, %v789, %v792
    %v812 = vsel %vm802, %v798, 1326507024
    %v813 = vsel %vm801, %v795, %v812
    %v814 = vsel %vm800, %v811, %v813
    %v815 = vshll.u32 %v775, 8
    %v816 = vmul.u32.u64.compose %v815, %v814
    %v817 = vextract.low.u32 %v816
    %v818 = vextract.high.u32 %v816
    %v819 = vmul.u32.u64.compose %v815, %v810
    %v820 = vextract.low.u32 %v819
    %v821 = vextract.high.u32 %v819
    %v822 = vmul.u32 %v815, %v806
    %v823 = vadd.s32 %v818, %v820
    %vm824 = vc.u32 %v818, %v820
    %v825 = vadd.s32 %v821, 1
    %v826 = vsel %vm824, %v825, %v821
    %v827 = vadd.s32 %v822, %v826
    %v828 = vadd.s32 %v827, 536870912
    %v829 = vshrl.u32 %v828, 30
    %v830 = vshll.u32 %v829, 30
    %v831 = vsub.s32 %v827, %v830
    %vm832 = vcmp.lt.s32.totalorder %v831, 0
    %v833 = vsub.s32 0, %v831
    %v834 = vsel %vm832, %v833, %v831
    %v835 = vclz %v834
    %v836 = vsub.s32 %v835, 2
    %vm837 = vcmp.gt.s32.totalorder 0, %v836
    %v838 = vsel %vm837, 0, %v836
    %v839 = vsub.s32 32, %v838
    %v840 = vshll.u32 %v831, %v838
    %v841 = vshrl.u32 %v823, %v839
    %v842 = vor.u32 %v840, %v841
    %v843 = vsub.s32 4294967266, %v838
    %v844 = vadd.s32 %v843, 127
    %v845 = vshll.u32 %v844, 23
    %v846 = vor.u32 4788187, %v845
    %v847 = vand.u32 2147483647, %v846
    %v849 = vcvt.s32.f32 %v842
    %v850 = vmul.f32 %v849, %v847
    %v851 = vxor.u32 %v850, 2147483648
    %v852 = vsel %vm769, %v851, %v850
    %v853 = vsub.s32 4, %v829
    %v854 = vsel %vm769, %v853, %v829
    %v855 = vsel %vm768, %v660, %v852
    %v856 = vsel %vm768, 0, %v854
    %v857 = vcosq.f32.pop %v855
    %v858 = vsinq.f32.pop %v855
    %vm859 = vweird.f32 %v660
    %v860 = vand.u32 %v856, 3
    %vm861 = vcmp.lt.s32.totalorder %v860, 2
    %vm862 = vcmp.eq.s32.totalorder %v860, 0
    %v863 = vxor.u32 %v858, 2147483648
    %v864 = vsel %vm862, %v857, %v863
    %vm865 = vcmp.eq.s32.totalorder %v860, 2
    %v866 = vxor.u32 %v857, 2147483648
    %v867 = vsel %vm865, %v866, %v858
    %v868 = vsel %vm861, %v864, %v867
    %v869 = vsel %vm859, nan, %v868
    %s870 = scalar_lea.vmem [#allocation5], 192
    %871 = vst [vmem:[%s870] sm:$0xff] %v869
    %s872 = scalar_lea.vmem [#allocation2], 8
    %v873 = vld [vmem:[%s872] sm:$0xff]
    %s874 = scalar_lea.vmem [#allocation5], 8
    %875 = vst [vmem:[%s874] sm:$0xff] %v873
    %v876 = vand.u32 2147483647, %v873
    %vm877 = vcmp.le.f32.partialorder %v876, 0.7853982
    %vm878 = vcmp.lt.s32.totalorder %v873, 0
    %v879 = vand.u32 %v873, 2139095040
    %v880 = vshrl.u32 %v879, 23
    %v881 = vsub.s32 %v880, 127
    %v882 = vand.u32 2147483647, %v873
    %v883 = vand.u32 %v882, 8388607
    %v884 = vor.u32 %v883, 8388608
    %v885 = vsub.s32 0, %v884
    %v886 = vadd.s32 %v881, 1
    %vm887 = vcmp.gt.s32.totalorder %v886, 0
    %v888 = vsel %vm887, %v886, 0
    %v889 = vshrl.u32 %v888, 5
    %v890 = vand.u32 %v888, 31
    %v891 = vsub.s32 32, %v890
    %v892 = vshrl.u32 683565275, %v891
    %v893 = vshll.u32 683565275, %v890
    %v894 = vshrl.u32 2475754826, %v891
    %v895 = vor.u32 %v893, %v894
    %v896 = vshll.u32 2475754826, %v890
    %v897 = vshrl.u32 2131351028, %v891
    %v898 = vor.u32 %v896, %v897
    %v899 = vshll.u32 2131351028, %v890
    %v900 = vshrl.u32 2102212464, %v891
    %v901 = vor.u32 %v899, %v900
    %v902 = vshll.u32 2102212464, %v890
    %v903 = vshrl.u32 920167782, %v891
    %v904 = vor.u32 %v902, %v903
    %v905 = vshll.u32 920167782, %v890
    %v906 = vshrl.u32 1326507024, %v891
    %v907 = vor.u32 %v905, %v906
    %vm908 = vcmp.lt.s32.totalorder %v889, 1
    %vm909 = vcmp.lt.s32.totalorder %v889, 2
    %vm910 = vcmp.lt.s32.totalorder %v889, 3
    %vm911 = vcmp.lt.s32.totalorder %v889, 4
    %v912 = vsel %vm908, %v892, %v895
    %v913 = vsel %vm911, %v901, 2102212464
    %v914 = vsel %vm910, %v898, %v913
    %v915 = vsel %vm909, %v912, %v914
    %v916 = vsel %vm908, %v895, %v898
    %v917 = vsel %vm911, %v904, 920167782
    %v918 = vsel %vm910, %v901, %v917
    %v919 = vsel %vm909, %v916, %v918
    %v920 = vsel %vm908, %v898, %v901
    %v921 = vsel %vm911, %v907, 1326507024
    %v922 = vsel %vm910, %v904, %v921
    %v923 = vsel %vm909, %v920, %v922
    %v924 = vshll.u32 %v884, 8
    %v925 = vmul.u32.u64.compose %v924, %v923
    %v926 = vextract.low.u32 %v925
    %v927 = vextract.high.u32 %v925
    %v928 = vmul.u32.u64.compose %v924, %v919
    %v929 = vextract.low.u32 %v928
    %v930 = vextract.high.u32 %v928
    %v931 = vmul.u32 %v924, %v915
    %v932 = vadd.s32 %v927, %v929
    %vm933 = vc.u32 %v927, %v929
    %v934 = vadd.s32 %v930, 1
    %v935 = vsel %vm933, %v934, %v930
    %v936 = vadd.s32 %v931, %v935
    %v937 = vadd.s32 %v936, 536870912
    %v938 = vshrl.u32 %v937, 30
    %v939 = vshll.u32 %v938, 30
    %v940 = vsub.s32 %v936, %v939
    %vm941 = vcmp.lt.s32.totalorder %v940, 0
    %v942 = vsub.s32 0, %v940
    %v943 = vsel %vm941, %v942, %v940
    %v944 = vclz %v943
    %v945 = vsub.s32 %v944, 2
    %vm946 = vcmp.gt.s32.totalorder 0, %v945
    %v947 = vsel %vm946, 0, %v945
    %v948 = vsub.s32 32, %v947
    %v949 = vshll.u32 %v940, %v947
    %v950 = vshrl.u32 %v932, %v948
    %v951 = vor.u32 %v949, %v950
    %v952 = vsub.s32 4294967266, %v947
    %v953 = vadd.s32 %v952, 127
    %v954 = vshll.u32 %v953, 23
    %v955 = vor.u32 4788187, %v954
    %v956 = vand.u32 2147483647, %v955
    %v958 = vcvt.s32.f32 %v951
    %v959 = vmul.f32 %v958, %v956
    %v960 = vxor.u32 %v959, 2147483648
    %v961 = vsel %vm878, %v960, %v959
    %v962 = vsub.s32 4, %v938
    %v963 = vsel %vm878, %v962, %v938
    %v964 = vsel %vm877, %v873, %v961
    %v965 = vsel %vm877, 0, %v963
    %v966 = vcosq.f32.pop %v964
    %v967 = vsinq.f32.pop %v964
    %vm968 = vweird.f32 %v873
    %v969 = vadd.s32 %v965, 3
    %v970 = vand.u32 %v969, 3
    %vm971 = vcmp.lt.s32.totalorder %v970, 2
    %vm972 = vcmp.eq.s32.totalorder %v970, 0
    %v973 = vxor.u32 %v967, 2147483648
    %v974 = vsel %vm972, %v966, %v973
    %vm975 = vcmp.eq.s32.totalorder %v970, 2
    %v976 = vxor.u32 %v966, 2147483648
    %v977 = vsel %vm975, %v976, %v967
    %v978 = vsel %vm971, %v974, %v977
    %v979 = vsel %vm968, nan, %v978
    %s980 = scalar_lea.vmem [#allocation5], 32
    %981 = vst [vmem:[%s980] sm:$0xff] %v979
    %v982 = vand.u32 2147483647, %v873
    %vm983 = vcmp.le.f32.partialorder %v982, 0.7853982
    %vm984 = vcmp.lt.s32.totalorder %v873, 0
    %v985 = vand.u32 %v873, 2139095040
    %v986 = vshrl.u32 %v985, 23
    %v987 = vsub.s32 %v986, 127
    %v988 = vand.u32 2147483647, %v873
    %v989 = vand.u32 %v988, 8388607
    %v990 = vor.u32 %v989, 8388608
    %v991 = vsub.s32 0, %v990
    %v992 = vadd.s32 %v987, 1
    %vm993 = vcmp.gt.s32.totalorder %v992, 0
    %v994 = vsel %vm993, %v992, 0
    %v995 = vshrl.u32 %v994, 5
    %v996 = vand.u32 %v994, 31
    %v997 = vsub.s32 32, %v996
    %v998 = vshrl.u32 683565275, %v997
    %v999 = vshll.u32 683565275, %v996
    %v1000 = vshrl.u32 2475754826, %v997
    %v1001 = vor.u32 %v999, %v1000
    %v1002 = vshll.u32 2475754826, %v996
    %v1003 = vshrl.u32 2131351028, %v997
    %v1004 = vor.u32 %v1002, %v1003
    %v1005 = vshll.u32 2131351028, %v996
    %v1006 = vshrl.u32 2102212464, %v997
    %v1007 = vor.u32 %v1005, %v1006
    %v1008 = vshll.u32 2102212464, %v996
    %v1009 = vshrl.u32 920167782, %v997
    %v1010 = vor.u32 %v1008, %v1009
    %v1011 = vshll.u32 920167782, %v996
    %v1012 = vshrl.u32 1326507024, %v997
    %v1013 = vor.u32 %v1011, %v1012
    %vm1014 = vcmp.lt.s32.totalorder %v995, 1
    %vm1015 = vcmp.lt.s32.totalorder %v995, 2
    %vm1016 = vcmp.lt.s32.totalorder %v995, 3
    %vm1017 = vcmp.lt.s32.totalorder %v995, 4
    %v1018 = vsel %vm1014, %v998, %v1001
    %v1019 = vsel %vm1017, %v1007, 2102212464
    %v1020 = vsel %vm1016, %v1004, %v1019
    %v1021 = vsel %vm1015, %v1018, %v1020
    %v1022 = vsel %vm1014, %v1001, %v1004
    %v1023 = vsel %vm1017, %v1010, 920167782
    %v1024 = vsel %vm1016, %v1007, %v1023
    %v1025 = vsel %vm1015, %v1022, %v1024
    %v1026 = vsel %vm1014, %v1004, %v1007
    %v1027 = vsel %vm1017, %v1013, 1326507024
    %v1028 = vsel %vm1016, %v1010, %v1027
    %v1029 = vsel %vm1015, %v1026, %v1028
    %v1030 = vshll.u32 %v990, 8
    %v1031 = vmul.u32.u64.compose %v1030, %v1029
    %v1032 = vextract.low.u32 %v1031
    %v1033 = vextract.high.u32 %v1031
    %v1034 = vmul.u32.u64.compose %v1030, %v1025
    %v1035 = vextract.low.u32 %v1034
    %v1036 = vextract.high.u32 %v1034
    %v1037 = vmul.u32 %v1030, %v1021
    %v1038 = vadd.s32 %v1033, %v1035
    %vm1039 = vc.u32 %v1033, %v1035
    %v1040 = vadd.s32 %v1036, 1
    %v1041 = vsel %vm1039, %v1040, %v1036
    %v1042 = vadd.s32 %v1037, %v1041
    %v1043 = vadd.s32 %v1042, 536870912
    %v1044 = vshrl.u32 %v1043, 30
    %v1045 = vshll.u32 %v1044, 30
    %v1046 = vsub.s32 %v1042, %v1045
    %vm1047 = vcmp.lt.s32.totalorder %v1046, 0
    %v1048 = vsub.s32 0, %v1046
    %v1049 = vsel %vm1047, %v1048, %v1046
    %v1050 = vclz %v1049
    %v1051 = vsub.s32 %v1050, 2
    %vm1052 = vcmp.gt.s32.totalorder 0, %v1051
    %v1053 = vsel %vm1052, 0, %v1051
    %v1054 = vsub.s32 32, %v1053
    %v1055 = vshll.u32 %v1046, %v1053
    %v1056 = vshrl.u32 %v1038, %v1054
    %v1057 = vor.u32 %v1055, %v1056
    %v1058 = vsub.s32 4294967266, %v1053
    %v1059 = vadd.s32 %v1058, 127
    %v1060 = vshll.u32 %v1059, 23
    %v1061 = vor.u32 4788187, %v1060
    %v1062 = vand.u32 2147483647, %v1061
    %v1064 = vcvt.s32.f32 %v1057
    %v1065 = vmul.f32 %v1064, %v1062
    %v1066 = vxor.u32 %v1065, 2147483648
    %v1067 = vsel %vm984, %v1066, %v1065
    %v1068 = vsub.s32 4, %v1044
    %v1069 = vsel %vm984, %v1068, %v1044
    %v1070 = vsel %vm983, %v873, %v1067
    %v1071 = vsel %vm983, 0, %v1069
    %v1072 = vcosq.f32.pop %v1070
    %v1073 = vsinq.f32.pop %v1070
    %vm1074 = vweird.f32 %v873
    %v1075 = vand.u32 %v1071, 3
    %vm1076 = vcmp.lt.s32.totalorder %v1075, 2
    %vm1077 = vcmp.eq.s32.totalorder %v1075, 0
    %v1078 = vxor.u32 %v1073, 2147483648
    %v1079 = vsel %vm1077, %v1072, %v1078
    %vm1080 = vcmp.eq.s32.totalorder %v1075, 2
    %v1081 = vxor.u32 %v1072, 2147483648
    %v1082 = vsel %vm1080, %v1081, %v1073
    %v1083 = vsel %vm1076, %v1079, %v1082
    %v1084 = vsel %vm1074, nan, %v1083
    %s1085 = scalar_lea.vmem [#allocation5], 56
    %1086 = vst [vmem:[%s1085] sm:$0xff] %v1084
    %v1087 = vmul.f32 %v873, 2.0
    %v1088 = vand.u32 2147483647, %v1087
    %vm1089 = vcmp.le.f32.partialorder %v1088, 0.7853982
    %vm1090 = vcmp.lt.s32.totalorder %v1087, 0
    %v1091 = vand.u32 %v1087, 2139095040
    %v1092 = vshrl.u32 %v1091, 23
    %v1093 = vsub.s32 %v1092, 127
    %v1094 = vand.u32 2147483647, %v1087
    %v1095 = vand.u32 %v1094, 8388607
    %v1096 = vor.u32 %v1095, 8388608
    %v1097 = vsub.s32 0, %v1096
    %v1098 = vadd.s32 %v1093, 1
    %vm1099 = vcmp.gt.s32.totalorder %v1098, 0
    %v1100 = vsel %vm1099, %v1098, 0
    %v1101 = vshrl.u32 %v1100, 5
    %v1102 = vand.u32 %v1100, 31
    %v1103 = vsub.s32 32, %v1102
    %v1104 = vshrl.u32 683565275, %v1103
    %v1105 = vshll.u32 683565275, %v1102
    %v1106 = vshrl.u32 2475754826, %v1103
    %v1107 = vor.u32 %v1105, %v1106
    %v1108 = vshll.u32 2475754826, %v1102
    %v1109 = vshrl.u32 2131351028, %v1103
    %v1110 = vor.u32 %v1108, %v1109
    %v1111 = vshll.u32 2131351028, %v1102
    %v1112 = vshrl.u32 2102212464, %v1103
    %v1113 = vor.u32 %v1111, %v1112
    %v1114 = vshll.u32 2102212464, %v1102
    %v1115 = vshrl.u32 920167782, %v1103
    %v1116 = vor.u32 %v1114, %v1115
    %v1117 = vshll.u32 920167782, %v1102
    %v1118 = vshrl.u32 1326507024, %v1103
    %v1119 = vor.u32 %v1117, %v1118
    %vm1120 = vcmp.lt.s32.totalorder %v1101, 1
    %vm1121 = vcmp.lt.s32.totalorder %v1101, 2
    %vm1122 = vcmp.lt.s32.totalorder %v1101, 3
    %vm1123 = vcmp.lt.s32.totalorder %v1101, 4
    %v1124 = vsel %vm1120, %v1104, %v1107
    %v1125 = vsel %vm1123, %v1113, 2102212464
    %v1126 = vsel %vm1122, %v1110, %v1125
    %v1127 = vsel %vm1121, %v1124, %v1126
    %v1128 = vsel %vm1120, %v1107, %v1110
    %v1129 = vsel %vm1123, %v1116, 920167782
    %v1130 = vsel %vm1122, %v1113, %v1129
    %v1131 = vsel %vm1121, %v1128, %v1130
    %v1132 = vsel %vm1120, %v1110, %v1113
    %v1133 = vsel %vm1123, %v1119, 1326507024
    %v1134 = vsel %vm1122, %v1116, %v1133
    %v1135 = vsel %vm1121, %v1132, %v1134
    %v1136 = vshll.u32 %v1096, 8
    %v1137 = vmul.u32.u64.compose %v1136, %v1135
    %v1138 = vextract.low.u32 %v1137
    %v1139 = vextract.high.u32 %v1137
    %v1140 = vmul.u32.u64.compose %v1136, %v1131
    %v1141 = vextract.low.u32 %v1140
    %v1142 = vextract.high.u32 %v1140
    %v1143 = vmul.u32 %v1136, %v1127
    %v1144 = vadd.s32 %v1139, %v1141
    %vm1145 = vc.u32 %v1139, %v1141
    %v1146 = vadd.s32 %v1142, 1
    %v1147 = vsel %vm1145, %v1146, %v1142
    %v1148 = vadd.s32 %v1143, %v1147
    %v1149 = vadd.s32 %v1148, 536870912
    %v1150 = vshrl.u32 %v1149, 30
    %v1151 = vshll.u32 %v1150, 30
    %v1152 = vsub.s32 %v1148, %v1151
    %vm1153 = vcmp.lt.s32.totalorder %v1152, 0
    %v1154 = vsub.s32 0, %v1152
    %v1155 = vsel %vm1153, %v1154, %v1152
    %v1156 = vclz %v1155
    %v1157 = vsub.s32 %v1156, 2
    %vm1158 = vcmp.gt.s32.totalorder 0, %v1157
    %v1159 = vsel %vm1158, 0, %v1157
    %v1160 = vsub.s32 32, %v1159
    %v1161 = vshll.u32 %v1152, %v1159
    %v1162 = vshrl.u32 %v1144, %v1160
    %v1163 = vor.u32 %v1161, %v1162
    %v1164 = vsub.s32 4294967266, %v1159
    %v1165 = vadd.s32 %v1164, 127
    %v1166 = vshll.u32 %v1165, 23
    %v1167 = vor.u32 4788187, %v1166
    %v1168 = vand.u32 2147483647, %v1167
    %v1170 = vcvt.s32.f32 %v1163
    %v1171 = vmul.f32 %v1170, %v1168
    %v1172 = vxor.u32 %v1171, 2147483648
    %v1173 = vsel %vm1090, %v1172, %v1171
    %v1174 = vsub.s32 4, %v1150
    %v1175 = vsel %vm1090, %v1174, %v1150
    %v1176 = vsel %vm1089, %v1087, %v1173
    %v1177 = vsel %vm1089, 0, %v1175
    %v1178 = vcosq.f32.pop %v1176
    %v1179 = vsinq.f32.pop %v1176
    %vm1180 = vweird.f32 %v1087
    %v1181 = vadd.s32 %v1177, 3
    %v1182 = vand.u32 %v1181, 3
    %vm1183 = vcmp.lt.s32.totalorder %v1182, 2
    %vm1184 = vcmp.eq.s32.totalorder %v1182, 0
    %v1185 = vxor.u32 %v1179, 2147483648
    %v1186 = vsel %vm1184, %v1178, %v1185
    %vm1187 = vcmp.eq.s32.totalorder %v1182, 2
    %v1188 = vxor.u32 %v1178, 2147483648
    %v1189 = vsel %vm1187, %v1188, %v1179
    %v1190 = vsel %vm1183, %v1186, %v1189
    %v1191 = vsel %vm1180, nan, %v1190
    %s1192 = scalar_lea.vmem [#allocation5], 80
    %1193 = vst [vmem:[%s1192] sm:$0xff] %v1191
    %v1194 = vand.u32 2147483647, %v1087
    %vm1195 = vcmp.le.f32.partialorder %v1194, 0.7853982
    %vm1196 = vcmp.lt.s32.totalorder %v1087, 0
    %v1197 = vand.u32 %v1087, 2139095040
    %v1198 = vshrl.u32 %v1197, 23
    %v1199 = vsub.s32 %v1198, 127
    %v1200 = vand.u32 2147483647, %v1087
    %v1201 = vand.u32 %v1200, 8388607
    %v1202 = vor.u32 %v1201, 8388608
    %v1203 = vsub.s32 0, %v1202
    %v1204 = vadd.s32 %v1199, 1
    %vm1205 = vcmp.gt.s32.totalorder %v1204, 0
    %v1206 = vsel %vm1205, %v1204, 0
    %v1207 = vshrl.u32 %v1206, 5
    %v1208 = vand.u32 %v1206, 31
    %v1209 = vsub.s32 32, %v1208
    %v1210 = vshrl.u32 683565275, %v1209
    %v1211 = vshll.u32 683565275, %v1208
    %v1212 = vshrl.u32 2475754826, %v1209
    %v1213 = vor.u32 %v1211, %v1212
    %v1214 = vshll.u32 2475754826, %v1208
    %v1215 = vshrl.u32 2131351028, %v1209
    %v1216 = vor.u32 %v1214, %v1215
    %v1217 = vshll.u32 2131351028, %v1208
    %v1218 = vshrl.u32 2102212464, %v1209
    %v1219 = vor.u32 %v1217, %v1218
    %v1220 = vshll.u32 2102212464, %v1208
    %v1221 = vshrl.u32 920167782, %v1209
    %v1222 = vor.u32 %v1220, %v1221
    %v1223 = vshll.u32 920167782, %v1208
    %v1224 = vshrl.u32 1326507024, %v1209
    %v1225 = vor.u32 %v1223, %v1224
    %vm1226 = vcmp.lt.s32.totalorder %v1207, 1
    %vm1227 = vcmp.lt.s32.totalorder %v1207, 2
    %vm1228 = vcmp.lt.s32.totalorder %v1207, 3
    %vm1229 = vcmp.lt.s32.totalorder %v1207, 4
    %v1230 = vsel %vm1226, %v1210, %v1213
    %v1231 = vsel %vm1229, %v1219, 2102212464
    %v1232 = vsel %vm1228, %v1216, %v1231
    %v1233 = vsel %vm1227, %v1230, %v1232
    %v1234 = vsel %vm1226, %v1213, %v1216
    %v1235 = vsel %vm1229, %v1222, 920167782
    %v1236 = vsel %vm1228, %v1219, %v1235
    %v1237 = vsel %vm1227, %v1234, %v1236
    %v1238 = vsel %vm1226, %v1216, %v1219
    %v1239 = vsel %vm1229, %v1225, 1326507024
    %v1240 = vsel %vm1228, %v1222, %v1239
    %v1241 = vsel %vm1227, %v1238, %v1240
    %v1242 = vshll.u32 %v1202, 8
    %v1243 = vmul.u32.u64.compose %v1242, %v1241
    %v1244 = vextract.low.u32 %v1243
    %v1245 = vextract.high.u32 %v1243
    %v1246 = vmul.u32.u64.compose %v1242, %v1237
    %v1247 = vextract.low.u32 %v1246
    %v1248 = vextract.high.u32 %v1246
    %v1249 = vmul.u32 %v1242, %v1233
    %v1250 = vadd.s32 %v1245, %v1247
    %vm1251 = vc.u32 %v1245, %v1247
    %v1252 = vadd.s32 %v1248, 1
    %v1253 = vsel %vm1251, %v1252, %v1248
    %v1254 = vadd.s32 %v1249, %v1253
    %v1255 = vadd.s32 %v1254, 536870912
    %v1256 = vshrl.u32 %v1255, 30
    %v1257 = vshll.u32 %v1256, 30
    %v1258 = vsub.s32 %v1254, %v1257
    %vm1259 = vcmp.lt.s32.totalorder %v1258, 0
    %v1260 = vsub.s32 0, %v1258
    %v1261 = vsel %vm1259, %v1260, %v1258
    %v1262 = vclz %v1261
    %v1263 = vsub.s32 %v1262, 2
    %vm1264 = vcmp.gt.s32.totalorder 0, %v1263
    %v1265 = vsel %vm1264, 0, %v1263
    %v1266 = vsub.s32 32, %v1265
    %v1267 = vshll.u32 %v1258, %v1265
    %v1268 = vshrl.u32 %v1250, %v1266
    %v1269 = vor.u32 %v1267, %v1268
    %v1270 = vsub.s32 4294967266, %v1265
    %v1271 = vadd.s32 %v1270, 127
    %v1272 = vshll.u32 %v1271, 23
    %v1273 = vor.u32 4788187, %v1272
    %v1274 = vand.u32 2147483647, %v1273
    %v1276 = vcvt.s32.f32 %v1269
    %v1277 = vmul.f32 %v1276, %v1274
    %v1278 = vxor.u32 %v1277, 2147483648
    %v1279 = vsel %vm1196, %v1278, %v1277
    %v1280 = vsub.s32 4, %v1256
    %v1281 = vsel %vm1196, %v1280, %v1256
    %v1282 = vsel %vm1195, %v1087, %v1279
    %v1283 = vsel %vm1195, 0, %v1281
    %v1284 = vcosq.f32.pop %v1282
    %v1285 = vsinq.f32.pop %v1282
    %vm1286 = vweird.f32 %v1087
    %v1287 = vand.u32 %v1283, 3
    %vm1288 = vcmp.lt.s32.totalorder %v1287, 2
    %vm1289 = vcmp.eq.s32.totalorder %v1287, 0
    %v1290 = vxor.u32 %v1285, 2147483648
    %v1291 = vsel %vm1289, %v1284, %v1290
    %vm1292 = vcmp.eq.s32.totalorder %v1287, 2
    %v1293 = vxor.u32 %v1284, 2147483648
    %v1294 = vsel %vm1292, %v1293, %v1285
    %v1295 = vsel %vm1288, %v1291, %v1294
    %v1296 = vsel %vm1286, nan, %v1295
    %s1297 = scalar_lea.vmem [#allocation5], 104
    %1298 = vst [vmem:[%s1297] sm:$0xff] %v1296
    %v1299 = vmul.f32 %v873, 4.0
    %v1300 = vand.u32 2147483647, %v1299
    %vm1301 = vcmp.le.f32.partialorder %v1300, 0.7853982
    %vm1302 = vcmp.lt.s32.totalorder %v1299, 0
    %v1303 = vand.u32 %v1299, 2139095040
    %v1304 = vshrl.u32 %v1303, 23
    %v1305 = vsub.s32 %v1304, 127
    %v1306 = vand.u32 2147483647, %v1299
    %v1307 = vand.u32 %v1306, 8388607
    %v1308 = vor.u32 %v1307, 8388608
    %v1309 = vsub.s32 0, %v1308
    %v1310 = vadd.s32 %v1305, 1
    %vm1311 = vcmp.gt.s32.totalorder %v1310, 0
    %v1312 = vsel %vm1311, %v1310, 0
    %v1313 = vshrl.u32 %v1312, 5
    %v1314 = vand.u32 %v1312, 31
    %v1315 = vsub.s32 32, %v1314
    %v1316 = vshrl.u32 683565275, %v1315
    %v1317 = vshll.u32 683565275, %v1314
    %v1318 = vshrl.u32 2475754826, %v1315
    %v1319 = vor.u32 %v1317, %v1318
    %v1320 = vshll.u32 2475754826, %v1314
    %v1321 = vshrl.u32 2131351028, %v1315
    %v1322 = vor.u32 %v1320, %v1321
    %v1323 = vshll.u32 2131351028, %v1314
    %v1324 = vshrl.u32 2102212464, %v1315
    %v1325 = vor.u32 %v1323, %v1324
    %v1326 = vshll.u32 2102212464, %v1314
    %v1327 = vshrl.u32 920167782, %v1315
    %v1328 = vor.u32 %v1326, %v1327
    %v1329 = vshll.u32 920167782, %v1314
    %v1330 = vshrl.u32 1326507024, %v1315
    %v1331 = vor.u32 %v1329, %v1330
    %vm1332 = vcmp.lt.s32.totalorder %v1313, 1
    %vm1333 = vcmp.lt.s32.totalorder %v1313, 2
    %vm1334 = vcmp.lt.s32.totalorder %v1313, 3
    %vm1335 = vcmp.lt.s32.totalorder %v1313, 4
    %v1336 = vsel %vm1332, %v1316, %v1319
    %v1337 = vsel %vm1335, %v1325, 2102212464
    %v1338 = vsel %vm1334, %v1322, %v1337
    %v1339 = vsel %vm1333, %v1336, %v1338
    %v1340 = vsel %vm1332, %v1319, %v1322
    %v1341 = vsel %vm1335, %v1328, 920167782
    %v1342 = vsel %vm1334, %v1325, %v1341
    %v1343 = vsel %vm1333, %v1340, %v1342
    %v1344 = vsel %vm1332, %v1322, %v1325
    %v1345 = vsel %vm1335, %v1331, 1326507024
    %v1346 = vsel %vm1334, %v1328, %v1345
    %v1347 = vsel %vm1333, %v1344, %v1346
    %v1348 = vshll.u32 %v1308, 8
    %v1349 = vmul.u32.u64.compose %v1348, %v1347
    %v1350 = vextract.low.u32 %v1349
    %v1351 = vextract.high.u32 %v1349
    %v1352 = vmul.u32.u64.compose %v1348, %v1343
    %v1353 = vextract.low.u32 %v1352
    %v1354 = vextract.high.u32 %v1352
    %v1355 = vmul.u32 %v1348, %v1339
    %v1356 = vadd.s32 %v1351, %v1353
    %vm1357 = vc.u32 %v1351, %v1353
    %v1358 = vadd.s32 %v1354, 1
    %v1359 = vsel %vm1357, %v1358, %v1354
    %v1360 = vadd.s32 %v1355, %v1359
    %v1361 = vadd.s32 %v1360, 536870912
    %v1362 = vshrl.u32 %v1361, 30
    %v1363 = vshll.u32 %v1362, 30
    %v1364 = vsub.s32 %v1360, %v1363
    %vm1365 = vcmp.lt.s32.totalorder %v1364, 0
    %v1366 = vsub.s32 0, %v1364
    %v1367 = vsel %vm1365, %v1366, %v1364
    %v1368 = vclz %v1367
    %v1369 = vsub.s32 %v1368, 2
    %vm1370 = vcmp.gt.s32.totalorder 0, %v1369
    %v1371 = vsel %vm1370, 0, %v1369
    %v1372 = vsub.s32 32, %v1371
    %v1373 = vshll.u32 %v1364, %v1371
    %v1374 = vshrl.u32 %v1356, %v1372
    %v1375 = vor.u32 %v1373, %v1374
    %v1376 = vsub.s32 4294967266, %v1371
    %v1377 = vadd.s32 %v1376, 127
    %v1378 = vshll.u32 %v1377, 23
    %v1379 = vor.u32 4788187, %v1378
    %v1380 = vand.u32 2147483647, %v1379
    %v1382 = vcvt.s32.f32 %v1375
    %v1383 = vmul.f32 %v1382, %v1380
    %v1384 = vxor.u32 %v1383, 2147483648
    %v1385 = vsel %vm1302, %v1384, %v1383
    %v1386 = vsub.s32 4, %v1362
    %v1387 = vsel %vm1302, %v1386, %v1362
    %v1388 = vsel %vm1301, %v1299, %v1385
    %v1389 = vsel %vm1301, 0, %v1387
    %v1390 = vcosq.f32.pop %v1388
    %v1391 = vsinq.f32.pop %v1388
    %vm1392 = vweird.f32 %v1299
    %v1393 = vadd.s32 %v1389, 3
    %v1394 = vand.u32 %v1393, 3
    %vm1395 = vcmp.lt.s32.totalorder %v1394, 2
    %vm1396 = vcmp.eq.s32.totalorder %v1394, 0
    %v1397 = vxor.u32 %v1391, 2147483648
    %v1398 = vsel %vm1396, %v1390, %v1397
    %vm1399 = vcmp.eq.s32.totalorder %v1394, 2
    %v1400 = vxor.u32 %v1390, 2147483648
    %v1401 = vsel %vm1399, %v1400, %v1391
    %v1402 = vsel %vm1395, %v1398, %v1401
    %v1403 = vsel %vm1392, nan, %v1402
    %s1404 = scalar_lea.vmem [#allocation5], 128
    %1405 = vst [vmem:[%s1404] sm:$0xff] %v1403
    %v1406 = vand.u32 2147483647, %v1299
    %vm1407 = vcmp.le.f32.partialorder %v1406, 0.7853982
    %vm1408 = vcmp.lt.s32.totalorder %v1299, 0
    %v1409 = vand.u32 %v1299, 2139095040
    %v1410 = vshrl.u32 %v1409, 23
    %v1411 = vsub.s32 %v1410, 127
    %v1412 = vand.u32 2147483647, %v1299
    %v1413 = vand.u32 %v1412, 8388607
    %v1414 = vor.u32 %v1413, 8388608
    %v1415 = vsub.s32 0, %v1414
    %v1416 = vadd.s32 %v1411, 1
    %vm1417 = vcmp.gt.s32.totalorder %v1416, 0
    %v1418 = vsel %vm1417, %v1416, 0
    %v1419 = vshrl.u32 %v1418, 5
    %v1420 = vand.u32 %v1418, 31
    %v1421 = vsub.s32 32, %v1420
    %v1422 = vshrl.u32 683565275, %v1421
    %v1423 = vshll.u32 683565275, %v1420
    %v1424 = vshrl.u32 2475754826, %v1421
    %v1425 = vor.u32 %v1423, %v1424
    %v1426 = vshll.u32 2475754826, %v1420
    %v1427 = vshrl.u32 2131351028, %v1421
    %v1428 = vor.u32 %v1426, %v1427
    %v1429 = vshll.u32 2131351028, %v1420
    %v1430 = vshrl.u32 2102212464, %v1421
    %v1431 = vor.u32 %v1429, %v1430
    %v1432 = vshll.u32 2102212464, %v1420
    %v1433 = vshrl.u32 920167782, %v1421
    %v1434 = vor.u32 %v1432, %v1433
    %v1435 = vshll.u32 920167782, %v1420
    %v1436 = vshrl.u32 1326507024, %v1421
    %v1437 = vor.u32 %v1435, %v1436
    %vm1438 = vcmp.lt.s32.totalorder %v1419, 1
    %vm1439 = vcmp.lt.s32.totalorder %v1419, 2
    %vm1440 = vcmp.lt.s32.totalorder %v1419, 3
    %vm1441 = vcmp.lt.s32.totalorder %v1419, 4
    %v1442 = vsel %vm1438, %v1422, %v1425
    %v1443 = vsel %vm1441, %v1431, 2102212464
    %v1444 = vsel %vm1440, %v1428, %v1443
    %v1445 = vsel %vm1439, %v1442, %v1444
    %v1446 = vsel %vm1438, %v1425, %v1428
    %v1447 = vsel %vm1441, %v1434, 920167782
    %v1448 = vsel %vm1440, %v1431, %v1447
    %v1449 = vsel %vm1439, %v1446, %v1448
    %v1450 = vsel %vm1438, %v1428, %v1431
    %v1451 = vsel %vm1441, %v1437, 1326507024
    %v1452 = vsel %vm1440, %v1434, %v1451
    %v1453 = vsel %vm1439, %v1450, %v1452
    %v1454 = vshll.u32 %v1414, 8
    %v1455 = vmul.u32.u64.compose %v1454, %v1453
    %v1456 = vextract.low.u32 %v1455
    %v1457 = vextract.high.u32 %v1455
    %v1458 = vmul.u32.u64.compose %v1454, %v1449
    %v1459 = vextract.low.u32 %v1458
    %v1460 = vextract.high.u32 %v1458
    %v1461 = vmul.u32 %v1454, %v1445
    %v1462 = vadd.s32 %v1457, %v1459
    %vm1463 = vc.u32 %v1457, %v1459
    %v1464 = vadd.s32 %v1460, 1
    %v1465 = vsel %vm1463, %v1464, %v1460
    %v1466 = vadd.s32 %v1461, %v1465
    %v1467 = vadd.s32 %v1466, 536870912
    %v1468 = vshrl.u32 %v1467, 30
    %v1469 = vshll.u32 %v1468, 30
    %v1470 = vsub.s32 %v1466, %v1469
    %vm1471 = vcmp.lt.s32.totalorder %v1470, 0
    %v1472 = vsub.s32 0, %v1470
    %v1473 = vsel %vm1471, %v1472, %v1470
    %v1474 = vclz %v1473
    %v1475 = vsub.s32 %v1474, 2
    %vm1476 = vcmp.gt.s32.totalorder 0, %v1475
    %v1477 = vsel %vm1476, 0, %v1475
    %v1478 = vsub.s32 32, %v1477
    %v1479 = vshll.u32 %v1470, %v1477
    %v1480 = vshrl.u32 %v1462, %v1478
    %v1481 = vor.u32 %v1479, %v1480
    %v1482 = vsub.s32 4294967266, %v1477
    %v1483 = vadd.s32 %v1482, 127
    %v1484 = vshll.u32 %v1483, 23
    %v1485 = vor.u32 4788187, %v1484
    %v1486 = vand.u32 2147483647, %v1485
    %v1488 = vcvt.s32.f32 %v1481
    %v1489 = vmul.f32 %v1488, %v1486
    %v1490 = vxor.u32 %v1489, 2147483648
    %v1491 = vsel %vm1408, %v1490, %v1489
    %v1492 = vsub.s32 4, %v1468
    %v1493 = vsel %vm1408, %v1492, %v1468
    %v1494 = vsel %vm1407, %v1299, %v1491
    %v1495 = vsel %vm1407, 0, %v1493
    %v1496 = vcosq.f32.pop %v1494
    %v1497 = vsinq.f32.pop %v1494
    %vm1498 = vweird.f32 %v1299
    %v1499 = vand.u32 %v1495, 3
    %vm1500 = vcmp.lt.s32.totalorder %v1499, 2
    %vm1501 = vcmp.eq.s32.totalorder %v1499, 0
    %v1502 = vxor.u32 %v1497, 2147483648
    %v1503 = vsel %vm1501, %v1496, %v1502
    %vm1504 = vcmp.eq.s32.totalorder %v1499, 2
    %v1505 = vxor.u32 %v1496, 2147483648
    %v1506 = vsel %vm1504, %v1505, %v1497
    %v1507 = vsel %vm1500, %v1503, %v1506
    %v1508 = vsel %vm1498, nan, %v1507
    %s1509 = scalar_lea.vmem [#allocation5], 152
    %1510 = vst [vmem:[%s1509] sm:$0xff] %v1508
    %v1511 = vmul.f32 %v873, 8.0
    %v1512 = vand.u32 2147483647, %v1511
    %vm1513 = vcmp.le.f32.partialorder %v1512, 0.7853982
    %vm1514 = vcmp.lt.s32.totalorder %v1511, 0
    %v1515 = vand.u32 %v1511, 2139095040
    %v1516 = vshrl.u32 %v1515, 23
    %v1517 = vsub.s32 %v1516, 127
    %v1518 = vand.u32 2147483647, %v1511
    %v1519 = vand.u32 %v1518, 8388607
    %v1520 = vor.u32 %v1519, 8388608
    %v1521 = vsub.s32 0, %v1520
    %v1522 = vadd.s32 %v1517, 1
    %vm1523 = vcmp.gt.s32.totalorder %v1522, 0
    %v1524 = vsel %vm1523, %v1522, 0
    %v1525 = vshrl.u32 %v1524, 5
    %v1526 = vand.u32 %v1524, 31
    %v1527 = vsub.s32 32, %v1526
    %v1528 = vshrl.u32 683565275, %v1527
    %v1529 = vshll.u32 683565275, %v1526
    %v1530 = vshrl.u32 2475754826, %v1527
    %v1531 = vor.u32 %v1529, %v1530
    %v1532 = vshll.u32 2475754826, %v1526
    %v1533 = vshrl.u32 2131351028, %v1527
    %v1534 = vor.u32 %v1532, %v1533
    %v1535 = vshll.u32 2131351028, %v1526
    %v1536 = vshrl.u32 2102212464, %v1527
    %v1537 = vor.u32 %v1535, %v1536
    %v1538 = vshll.u32 2102212464, %v1526
    %v1539 = vshrl.u32 920167782, %v1527
    %v1540 = vor.u32 %v1538, %v1539
    %v1541 = vshll.u32 920167782, %v1526
    %v1542 = vshrl.u32 1326507024, %v1527
    %v1543 = vor.u32 %v1541, %v1542
    %vm1544 = vcmp.lt.s32.totalorder %v1525, 1
    %vm1545 = vcmp.lt.s32.totalorder %v1525, 2
    %vm1546 = vcmp.lt.s32.totalorder %v1525, 3
    %vm1547 = vcmp.lt.s32.totalorder %v1525, 4
    %v1548 = vsel %vm1544, %v1528, %v1531
    %v1549 = vsel %vm1547, %v1537, 2102212464
    %v1550 = vsel %vm1546, %v1534, %v1549
    %v1551 = vsel %vm1545, %v1548, %v1550
    %v1552 = vsel %vm1544, %v1531, %v1534
    %v1553 = vsel %vm1547, %v1540, 920167782
    %v1554 = vsel %vm1546, %v1537, %v1553
    %v1555 = vsel %vm1545, %v1552, %v1554
    %v1556 = vsel %vm1544, %v1534, %v1537
    %v1557 = vsel %vm1547, %v1543, 1326507024
    %v1558 = vsel %vm1546, %v1540, %v1557
    %v1559 = vsel %vm1545, %v1556, %v1558
    %v1560 = vshll.u32 %v1520, 8
    %v1561 = vmul.u32.u64.compose %v1560, %v1559
    %v1562 = vextract.low.u32 %v1561
    %v1563 = vextract.high.u32 %v1561
    %v1564 = vmul.u32.u64.compose %v1560, %v1555
    %v1565 = vextract.low.u32 %v1564
    %v1566 = vextract.high.u32 %v1564
    %v1567 = vmul.u32 %v1560, %v1551
    %v1568 = vadd.s32 %v1563, %v1565
    %vm1569 = vc.u32 %v1563, %v1565
    %v1570 = vadd.s32 %v1566, 1
    %v1571 = vsel %vm1569, %v1570, %v1566
    %v1572 = vadd.s32 %v1567, %v1571
    %v1573 = vadd.s32 %v1572, 536870912
    %v1574 = vshrl.u32 %v1573, 30
    %v1575 = vshll.u32 %v1574, 30
    %v1576 = vsub.s32 %v1572, %v1575
    %vm1577 = vcmp.lt.s32.totalorder %v1576, 0
    %v1578 = vsub.s32 0, %v1576
    %v1579 = vsel %vm1577, %v1578, %v1576
    %v1580 = vclz %v1579
    %v1581 = vsub.s32 %v1580, 2
    %vm1582 = vcmp.gt.s32.totalorder 0, %v1581
    %v1583 = vsel %vm1582, 0, %v1581
    %v1584 = vsub.s32 32, %v1583
    %v1585 = vshll.u32 %v1576, %v1583
    %v1586 = vshrl.u32 %v1568, %v1584
    %v1587 = vor.u32 %v1585, %v1586
    %v1588 = vsub.s32 4294967266, %v1583
    %v1589 = vadd.s32 %v1588, 127
    %v1590 = vshll.u32 %v1589, 23
    %v1591 = vor.u32 4788187, %v1590
    %v1592 = vand.u32 2147483647, %v1591
    %v1594 = vcvt.s32.f32 %v1587
    %v1595 = vmul.f32 %v1594, %v1592
    %v1596 = vxor.u32 %v1595, 2147483648
    %v1597 = vsel %vm1514, %v1596, %v1595
    %v1598 = vsub.s32 4, %v1574
    %v1599 = vsel %vm1514, %v1598, %v1574
    %v1600 = vsel %vm1513, %v1511, %v1597
    %v1601 = vsel %vm1513, 0, %v1599
    %v1602 = vcosq.f32.pop %v1600
    %v1603 = vsinq.f32.pop %v1600
    %vm1604 = vweird.f32 %v1511
    %v1605 = vadd.s32 %v1601, 3
    %v1606 = vand.u32 %v1605, 3
    %vm1607 = vcmp.lt.s32.totalorder %v1606, 2
    %vm1608 = vcmp.eq.s32.totalorder %v1606, 0
    %v1609 = vxor.u32 %v1603, 2147483648
    %v1610 = vsel %vm1608, %v1602, %v1609
    %vm1611 = vcmp.eq.s32.totalorder %v1606, 2
    %v1612 = vxor.u32 %v1602, 2147483648
    %v1613 = vsel %vm1611, %v1612, %v1603
    %v1614 = vsel %vm1607, %v1610, %v1613
    %v1615 = vsel %vm1604, nan, %v1614
    %s1616 = scalar_lea.vmem [#allocation5], 176
    %1617 = vst [vmem:[%s1616] sm:$0xff] %v1615
    %v1618 = vand.u32 2147483647, %v1511
    %vm1619 = vcmp.le.f32.partialorder %v1618, 0.7853982
    %vm1620 = vcmp.lt.s32.totalorder %v1511, 0
    %v1621 = vand.u32 %v1511, 2139095040
    %v1622 = vshrl.u32 %v1621, 23
    %v1623 = vsub.s32 %v1622, 127
    %v1624 = vand.u32 2147483647, %v1511
    %v1625 = vand.u32 %v1624, 8388607
    %v1626 = vor.u32 %v1625, 8388608
    %v1627 = vsub.s32 0, %v1626
    %v1628 = vadd.s32 %v1623, 1
    %vm1629 = vcmp.gt.s32.totalorder %v1628, 0
    %v1630 = vsel %vm1629, %v1628, 0
    %v1631 = vshrl.u32 %v1630, 5
    %v1632 = vand.u32 %v1630, 31
    %v1633 = vsub.s32 32, %v1632
    %v1634 = vshrl.u32 683565275, %v1633
    %v1635 = vshll.u32 683565275, %v1632
    %v1636 = vshrl.u32 2475754826, %v1633
    %v1637 = vor.u32 %v1635, %v1636
    %v1638 = vshll.u32 2475754826, %v1632
    %v1639 = vshrl.u32 2131351028, %v1633
    %v1640 = vor.u32 %v1638, %v1639
    %v1641 = vshll.u32 2131351028, %v1632
    %v1642 = vshrl.u32 2102212464, %v1633
    %v1643 = vor.u32 %v1641, %v1642
    %v1644 = vshll.u32 2102212464, %v1632
    %v1645 = vshrl.u32 920167782, %v1633
    %v1646 = vor.u32 %v1644, %v1645
    %v1647 = vshll.u32 920167782, %v1632
    %v1648 = vshrl.u32 1326507024, %v1633
    %v1649 = vor.u32 %v1647, %v1648
    %vm1650 = vcmp.lt.s32.totalorder %v1631, 1
    %vm1651 = vcmp.lt.s32.totalorder %v1631, 2
    %vm1652 = vcmp.lt.s32.totalorder %v1631, 3
    %vm1653 = vcmp.lt.s32.totalorder %v1631, 4
    %v1654 = vsel %vm1650, %v1634, %v1637
    %v1655 = vsel %vm1653, %v1643, 2102212464
    %v1656 = vsel %vm1652, %v1640, %v1655
    %v1657 = vsel %vm1651, %v1654, %v1656
    %v1658 = vsel %vm1650, %v1637, %v1640
    %v1659 = vsel %vm1653, %v1646, 920167782
    %v1660 = vsel %vm1652, %v1643, %v1659
    %v1661 = vsel %vm1651, %v1658, %v1660
    %v1662 = vsel %vm1650, %v1640, %v1643
    %v1663 = vsel %vm1653, %v1649, 1326507024
    %v1664 = vsel %vm1652, %v1646, %v1663
    %v1665 = vsel %vm1651, %v1662, %v1664
    %v1666 = vshll.u32 %v1626, 8
    %v1667 = vmul.u32.u64.compose %v1666, %v1665
    %v1668 = vextract.low.u32 %v1667
    %v1669 = vextract.high.u32 %v1667
    %v1670 = vmul.u32.u64.compose %v1666, %v1661
    %v1671 = vextract.low.u32 %v1670
    %v1672 = vextract.high.u32 %v1670
    %v1673 = vmul.u32 %v1666, %v1657
    %v1674 = vadd.s32 %v1669, %v1671
    %vm1675 = vc.u32 %v1669, %v1671
    %v1676 = vadd.s32 %v1672, 1
    %v1677 = vsel %vm1675, %v1676, %v1672
    %v1678 = vadd.s32 %v1673, %v1677
    %v1679 = vadd.s32 %v1678, 536870912
    %v1680 = vshrl.u32 %v1679, 30
    %v1681 = vshll.u32 %v1680, 30
    %v1682 = vsub.s32 %v1678, %v1681
    %vm1683 = vcmp.lt.s32.totalorder %v1682, 0
    %v1684 = vsub.s32 0, %v1682
    %v1685 = vsel %vm1683, %v1684, %v1682
    %v1686 = vclz %v1685
    %v1687 = vsub.s32 %v1686, 2
    %vm1688 = vcmp.gt.s32.totalorder 0, %v1687
    %v1689 = vsel %vm1688, 0, %v1687
    %v1690 = vsub.s32 32, %v1689
    %v1691 = vshll.u32 %v1682, %v1689
    %v1692 = vshrl.u32 %v1674, %v1690
    %v1693 = vor.u32 %v1691, %v1692
    %v1694 = vsub.s32 4294967266, %v1689
    %v1695 = vadd.s32 %v1694, 127
    %v1696 = vshll.u32 %v1695, 23
    %v1697 = vor.u32 4788187, %v1696
    %v1698 = vand.u32 2147483647, %v1697
    %v1700 = vcvt.s32.f32 %v1693
    %v1701 = vmul.f32 %v1700, %v1698
    %v1702 = vxor.u32 %v1701, 2147483648
    %v1703 = vsel %vm1620, %v1702, %v1701
    %v1704 = vsub.s32 4, %v1680
    %v1705 = vsel %vm1620, %v1704, %v1680
    %v1706 = vsel %vm1619, %v1511, %v1703
    %v1707 = vsel %vm1619, 0, %v1705
    %v1708 = vcosq.f32.pop %v1706
    %v1709 = vsinq.f32.pop %v1706
    %vm1710 = vweird.f32 %v1511
    %v1711 = vand.u32 %v1707, 3
    %vm1712 = vcmp.lt.s32.totalorder %v1711, 2
    %vm1713 = vcmp.eq.s32.totalorder %v1711, 0
    %v1714 = vxor.u32 %v1709, 2147483648
    %v1715 = vsel %vm1713, %v1708, %v1714
    %vm1716 = vcmp.eq.s32.totalorder %v1711, 2
    %v1717 = vxor.u32 %v1708, 2147483648
    %v1718 = vsel %vm1716, %v1717, %v1709
    %v1719 = vsel %vm1712, %v1715, %v1718
    %v1720 = vsel %vm1710, nan, %v1719
    %s1721 = scalar_lea.vmem [#allocation5], 200
    %1722 = vst [vmem:[%s1721] sm:$0xff] %v1720
    %s1723 = scalar_lea.vmem [#allocation2], 16
    %v1724 = vld [vmem:[%s1723] sm:$0xff]
    %s1725 = scalar_lea.vmem [#allocation5], 16
    %1726 = vst [vmem:[%s1725] sm:$0xff] %v1724
    %v1727 = vand.u32 2147483647, %v1724
    %vm1728 = vcmp.le.f32.partialorder %v1727, 0.7853982
    %vm1729 = vcmp.lt.s32.totalorder %v1724, 0
    %v1730 = vand.u32 %v1724, 2139095040
    %v1731 = vshrl.u32 %v1730, 23
    %v1732 = vsub.s32 %v1731, 127
    %v1733 = vand.u32 2147483647, %v1724
    %v1734 = vand.u32 %v1733, 8388607
    %v1735 = vor.u32 %v1734, 8388608
    %v1736 = vsub.s32 0, %v1735
    %v1737 = vadd.s32 %v1732, 1
    %vm1738 = vcmp.gt.s32.totalorder %v1737, 0
    %v1739 = vsel %vm1738, %v1737, 0
    %v1740 = vshrl.u32 %v1739, 5
    %v1741 = vand.u32 %v1739, 31
    %v1742 = vsub.s32 32, %v1741
    %v1743 = vshrl.u32 683565275, %v1742
    %v1744 = vshll.u32 683565275, %v1741
    %v1745 = vshrl.u32 2475754826, %v1742
    %v1746 = vor.u32 %v1744, %v1745
    %v1747 = vshll.u32 2475754826, %v1741
    %v1748 = vshrl.u32 2131351028, %v1742
    %v1749 = vor.u32 %v1747, %v1748
    %v1750 = vshll.u32 2131351028, %v1741
    %v1751 = vshrl.u32 2102212464, %v1742
    %v1752 = vor.u32 %v1750, %v1751
    %v1753 = vshll.u32 2102212464, %v1741
    %v1754 = vshrl.u32 920167782, %v1742
    %v1755 = vor.u32 %v1753, %v1754
    %v1756 = vshll.u32 920167782, %v1741
    %v1757 = vshrl.u32 1326507024, %v1742
    %v1758 = vor.u32 %v1756, %v1757
    %vm1759 = vcmp.lt.s32.totalorder %v1740, 1
    %vm1760 = vcmp.lt.s32.totalorder %v1740, 2
    %vm1761 = vcmp.lt.s32.totalorder %v1740, 3
    %vm1762 = vcmp.lt.s32.totalorder %v1740, 4
    %v1763 = vsel %vm1759, %v1743, %v1746
    %v1764 = vsel %vm1762, %v1752, 2102212464
    %v1765 = vsel %vm1761, %v1749, %v1764
    %v1766 = vsel %vm1760, %v1763, %v1765
    %v1767 = vsel %vm1759, %v1746, %v1749
    %v1768 = vsel %vm1762, %v1755, 920167782
    %v1769 = vsel %vm1761, %v1752, %v1768
    %v1770 = vsel %vm1760, %v1767, %v1769
    %v1771 = vsel %vm1759, %v1749, %v1752
    %v1772 = vsel %vm1762, %v1758, 1326507024
    %v1773 = vsel %vm1761, %v1755, %v1772
    %v1774 = vsel %vm1760, %v1771, %v1773
    %v1775 = vshll.u32 %v1735, 8
    %v1776 = vmul.u32.u64.compose %v1775, %v1774
    %v1777 = vextract.low.u32 %v1776
    %v1778 = vextract.high.u32 %v1776
    %v1779 = vmul.u32.u64.compose %v1775, %v1770
    %v1780 = vextract.low.u32 %v1779
    %v1781 = vextract.high.u32 %v1779
    %v1782 = vmul.u32 %v1775, %v1766
    %v1783 = vadd.s32 %v1778, %v1780
    %vm1784 = vc.u32 %v1778, %v1780
    %v1785 = vadd.s32 %v1781, 1
    %v1786 = vsel %vm1784, %v1785, %v1781
    %v1787 = vadd.s32 %v1782, %v1786
    %v1788 = vadd.s32 %v1787, 536870912
    %v1789 = vshrl.u32 %v1788, 30
    %v1790 = vshll.u32 %v1789, 30
    %v1791 = vsub.s32 %v1787, %v1790
    %vm1792 = vcmp.lt.s32.totalorder %v1791, 0
    %v1793 = vsub.s32 0, %v1791
    %v1794 = vsel %vm1792, %v1793, %v1791
    %v1795 = vclz %v1794
    %v1796 = vsub.s32 %v1795, 2
    %vm1797 = vcmp.gt.s32.totalorder 0, %v1796
    %v1798 = vsel %vm1797, 0, %v1796
    %v1799 = vsub.s32 32, %v1798
    %v1800 = vshll.u32 %v1791, %v1798
    %v1801 = vshrl.u32 %v1783, %v1799
    %v1802 = vor.u32 %v1800, %v1801
    %v1803 = vsub.s32 4294967266, %v1798
    %v1804 = vadd.s32 %v1803, 127
    %v1805 = vshll.u32 %v1804, 23
    %v1806 = vor.u32 4788187, %v1805
    %v1807 = vand.u32 2147483647, %v1806
    %v1809 = vcvt.s32.f32 %v1802
    %v1810 = vmul.f32 %v1809, %v1807
    %v1811 = vxor.u32 %v1810, 2147483648
    %v1812 = vsel %vm1729, %v1811, %v1810
    %v1813 = vsub.s32 4, %v1789
    %v1814 = vsel %vm1729, %v1813, %v1789
    %v1815 = vsel %vm1728, %v1724, %v1812
    %v1816 = vsel %vm1728, 0, %v1814
    %v1817 = vcosq.f32.pop %v1815
    %v1818 = vsinq.f32.pop %v1815
    %vm1819 = vweird.f32 %v1724
    %v1820 = vadd.s32 %v1816, 3
    %v1821 = vand.u32 %v1820, 3
    %vm1822 = vcmp.lt.s32.totalorder %v1821, 2
    %vm1823 = vcmp.eq.s32.totalorder %v1821, 0
    %v1824 = vxor.u32 %v1818, 2147483648
    %v1825 = vsel %vm1823, %v1817, %v1824
    %vm1826 = vcmp.eq.s32.totalorder %v1821, 2
    %v1827 = vxor.u32 %v1817, 2147483648
    %v1828 = vsel %vm1826, %v1827, %v1818
    %v1829 = vsel %vm1822, %v1825, %v1828
    %v1830 = vsel %vm1819, nan, %v1829
    %s1831 = scalar_lea.vmem [#allocation5], 40
    %1832 = vst [vmem:[%s1831] sm:$0xff] %v1830
    %v1833 = vand.u32 2147483647, %v1724
    %vm1834 = vcmp.le.f32.partialorder %v1833, 0.7853982
    %vm1835 = vcmp.lt.s32.totalorder %v1724, 0
    %v1836 = vand.u32 %v1724, 2139095040
    %v1837 = vshrl.u32 %v1836, 23
    %v1838 = vsub.s32 %v1837, 127
    %v1839 = vand.u32 2147483647, %v1724
    %v1840 = vand.u32 %v1839, 8388607
    %v1841 = vor.u32 %v1840, 8388608
    %v1842 = vsub.s32 0, %v1841
    %v1843 = vadd.s32 %v1838, 1
    %vm1844 = vcmp.gt.s32.totalorder %v1843, 0
    %v1845 = vsel %vm1844, %v1843, 0
    %v1846 = vshrl.u32 %v1845, 5
    %v1847 = vand.u32 %v1845, 31
    %v1848 = vsub.s32 32, %v1847
    %v1849 = vshrl.u32 683565275, %v1848
    %v1850 = vshll.u32 683565275, %v1847
    %v1851 = vshrl.u32 2475754826, %v1848
    %v1852 = vor.u32 %v1850, %v1851
    %v1853 = vshll.u32 2475754826, %v1847
    %v1854 = vshrl.u32 2131351028, %v1848
    %v1855 = vor.u32 %v1853, %v1854
    %v1856 = vshll.u32 2131351028, %v1847
    %v1857 = vshrl.u32 2102212464, %v1848
    %v1858 = vor.u32 %v1856, %v1857
    %v1859 = vshll.u32 2102212464, %v1847
    %v1860 = vshrl.u32 920167782, %v1848
    %v1861 = vor.u32 %v1859, %v1860
    %v1862 = vshll.u32 920167782, %v1847
    %v1863 = vshrl.u32 1326507024, %v1848
    %v1864 = vor.u32 %v1862, %v1863
    %vm1865 = vcmp.lt.s32.totalorder %v1846, 1
    %vm1866 = vcmp.lt.s32.totalorder %v1846, 2
    %vm1867 = vcmp.lt.s32.totalorder %v1846, 3
    %vm1868 = vcmp.lt.s32.totalorder %v1846, 4
    %v1869 = vsel %vm1865, %v1849, %v1852
    %v1870 = vsel %vm1868, %v1858, 2102212464
    %v1871 = vsel %vm1867, %v1855, %v1870
    %v1872 = vsel %vm1866, %v1869, %v1871
    %v1873 = vsel %vm1865, %v1852, %v1855
    %v1874 = vsel %vm1868, %v1861, 920167782
    %v1875 = vsel %vm1867, %v1858, %v1874
    %v1876 = vsel %vm1866, %v1873, %v1875
    %v1877 = vsel %vm1865, %v1855, %v1858
    %v1878 = vsel %vm1868, %v1864, 1326507024
    %v1879 = vsel %vm1867, %v1861, %v1878
    %v1880 = vsel %vm1866, %v1877, %v1879
    %v1881 = vshll.u32 %v1841, 8
    %v1882 = vmul.u32.u64.compose %v1881, %v1880
    %v1883 = vextract.low.u32 %v1882
    %v1884 = vextract.high.u32 %v1882
    %v1885 = vmul.u32.u64.compose %v1881, %v1876
    %v1886 = vextract.low.u32 %v1885
    %v1887 = vextract.high.u32 %v1885
    %v1888 = vmul.u32 %v1881, %v1872
    %v1889 = vadd.s32 %v1884, %v1886
    %vm1890 = vc.u32 %v1884, %v1886
    %v1891 = vadd.s32 %v1887, 1
    %v1892 = vsel %vm1890, %v1891, %v1887
    %v1893 = vadd.s32 %v1888, %v1892
    %v1894 = vadd.s32 %v1893, 536870912
    %v1895 = vshrl.u32 %v1894, 30
    %v1896 = vshll.u32 %v1895, 30
    %v1897 = vsub.s32 %v1893, %v1896
    %vm1898 = vcmp.lt.s32.totalorder %v1897, 0
    %v1899 = vsub.s32 0, %v1897
    %v1900 = vsel %vm1898, %v1899, %v1897
    %v1901 = vclz %v1900
    %v1902 = vsub.s32 %v1901, 2
    %vm1903 = vcmp.gt.s32.totalorder 0, %v1902
    %v1904 = vsel %vm1903, 0, %v1902
    %v1905 = vsub.s32 32, %v1904
    %v1906 = vshll.u32 %v1897, %v1904
    %v1907 = vshrl.u32 %v1889, %v1905
    %v1908 = vor.u32 %v1906, %v1907
    %v1909 = vsub.s32 4294967266, %v1904
    %v1910 = vadd.s32 %v1909, 127
    %v1911 = vshll.u32 %v1910, 23
    %v1912 = vor.u32 4788187, %v1911
    %v1913 = vand.u32 2147483647, %v1912
    %v1915 = vcvt.s32.f32 %v1908
    %v1916 = vmul.f32 %v1915, %v1913
    %v1917 = vxor.u32 %v1916, 2147483648
    %v1918 = vsel %vm1835, %v1917, %v1916
    %v1919 = vsub.s32 4, %v1895
    %v1920 = vsel %vm1835, %v1919, %v1895
    %v1921 = vsel %vm1834, %v1724, %v1918
    %v1922 = vsel %vm1834, 0, %v1920
    %v1923 = vcosq.f32.pop %v1921
    %v1924 = vsinq.f32.pop %v1921
    %vm1925 = vweird.f32 %v1724
    %v1926 = vand.u32 %v1922, 3
    %vm1927 = vcmp.lt.s32.totalorder %v1926, 2
    %vm1928 = vcmp.eq.s32.totalorder %v1926, 0
    %v1929 = vxor.u32 %v1924, 2147483648
    %v1930 = vsel %vm1928, %v1923, %v1929
    %vm1931 = vcmp.eq.s32.totalorder %v1926, 2
    %v1932 = vxor.u32 %v1923, 2147483648
    %v1933 = vsel %vm1931, %v1932, %v1924
    %v1934 = vsel %vm1927, %v1930, %v1933
    %v1935 = vsel %vm1925, nan, %v1934
    %s1936 = scalar_lea.vmem [#allocation5], 64
    %1937 = vst [vmem:[%s1936] sm:$0xff] %v1935
    %v1938 = vmul.f32 %v1724, 2.0
    %v1939 = vand.u32 2147483647, %v1938
    %vm1940 = vcmp.le.f32.partialorder %v1939, 0.7853982
    %vm1941 = vcmp.lt.s32.totalorder %v1938, 0
    %v1942 = vand.u32 %v1938, 2139095040
    %v1943 = vshrl.u32 %v1942, 23
    %v1944 = vsub.s32 %v1943, 127
    %v1945 = vand.u32 2147483647, %v1938
    %v1946 = vand.u32 %v1945, 8388607
    %v1947 = vor.u32 %v1946, 8388608
    %v1948 = vsub.s32 0, %v1947
    %v1949 = vadd.s32 %v1944, 1
    %vm1950 = vcmp.gt.s32.totalorder %v1949, 0
    %v1951 = vsel %vm1950, %v1949, 0
    %v1952 = vshrl.u32 %v1951, 5
    %v1953 = vand.u32 %v1951, 31
    %v1954 = vsub.s32 32, %v1953
    %v1955 = vshrl.u32 683565275, %v1954
    %v1956 = vshll.u32 683565275, %v1953
    %v1957 = vshrl.u32 2475754826, %v1954
    %v1958 = vor.u32 %v1956, %v1957
    %v1959 = vshll.u32 2475754826, %v1953
    %v1960 = vshrl.u32 2131351028, %v1954
    %v1961 = vor.u32 %v1959, %v1960
    %v1962 = vshll.u32 2131351028, %v1953
    %v1963 = vshrl.u32 2102212464, %v1954
    %v1964 = vor.u32 %v1962, %v1963
    %v1965 = vshll.u32 2102212464, %v1953
    %v1966 = vshrl.u32 920167782, %v1954
    %v1967 = vor.u32 %v1965, %v1966
    %v1968 = vshll.u32 920167782, %v1953
    %v1969 = vshrl.u32 1326507024, %v1954
    %v1970 = vor.u32 %v1968, %v1969
    %vm1971 = vcmp.lt.s32.totalorder %v1952, 1
    %vm1972 = vcmp.lt.s32.totalorder %v1952, 2
    %vm1973 = vcmp.lt.s32.totalorder %v1952, 3
    %vm1974 = vcmp.lt.s32.totalorder %v1952, 4
    %v1975 = vsel %vm1971, %v1955, %v1958
    %v1976 = vsel %vm1974, %v1964, 2102212464
    %v1977 = vsel %vm1973, %v1961, %v1976
    %v1978 = vsel %vm1972, %v1975, %v1977
    %v1979 = vsel %vm1971, %v1958, %v1961
    %v1980 = vsel %vm1974, %v1967, 920167782
    %v1981 = vsel %vm1973, %v1964, %v1980
    %v1982 = vsel %vm1972, %v1979, %v1981
    %v1983 = vsel %vm1971, %v1961, %v1964
    %v1984 = vsel %vm1974, %v1970, 1326507024
    %v1985 = vsel %vm1973, %v1967, %v1984
    %v1986 = vsel %vm1972, %v1983, %v1985
    %v1987 = vshll.u32 %v1947, 8
    %v1988 = vmul.u32.u64.compose %v1987, %v1986
    %v1989 = vextract.low.u32 %v1988
    %v1990 = vextract.high.u32 %v1988
    %v1991 = vmul.u32.u64.compose %v1987, %v1982
    %v1992 = vextract.low.u32 %v1991
    %v1993 = vextract.high.u32 %v1991
    %v1994 = vmul.u32 %v1987, %v1978
    %v1995 = vadd.s32 %v1990, %v1992
    %vm1996 = vc.u32 %v1990, %v1992
    %v1997 = vadd.s32 %v1993, 1
    %v1998 = vsel %vm1996, %v1997, %v1993
    %v1999 = vadd.s32 %v1994, %v1998
    %v2000 = vadd.s32 %v1999, 536870912
    %v2001 = vshrl.u32 %v2000, 30
    %v2002 = vshll.u32 %v2001, 30
    %v2003 = vsub.s32 %v1999, %v2002
    %vm2004 = vcmp.lt.s32.totalorder %v2003, 0
    %v2005 = vsub.s32 0, %v2003
    %v2006 = vsel %vm2004, %v2005, %v2003
    %v2007 = vclz %v2006
    %v2008 = vsub.s32 %v2007, 2
    %vm2009 = vcmp.gt.s32.totalorder 0, %v2008
    %v2010 = vsel %vm2009, 0, %v2008
    %v2011 = vsub.s32 32, %v2010
    %v2012 = vshll.u32 %v2003, %v2010
    %v2013 = vshrl.u32 %v1995, %v2011
    %v2014 = vor.u32 %v2012, %v2013
    %v2015 = vsub.s32 4294967266, %v2010
    %v2016 = vadd.s32 %v2015, 127
    %v2017 = vshll.u32 %v2016, 23
    %v2018 = vor.u32 4788187, %v2017
    %v2019 = vand.u32 2147483647, %v2018
    %v2021 = vcvt.s32.f32 %v2014
    %v2022 = vmul.f32 %v2021, %v2019
    %v2023 = vxor.u32 %v2022, 2147483648
    %v2024 = vsel %vm1941, %v2023, %v2022
    %v2025 = vsub.s32 4, %v2001
    %v2026 = vsel %vm1941, %v2025, %v2001
    %v2027 = vsel %vm1940, %v1938, %v2024
    %v2028 = vsel %vm1940, 0, %v2026
    %v2029 = vcosq.f32.pop %v2027
    %v2030 = vsinq.f32.pop %v2027
    %vm2031 = vweird.f32 %v1938
    %v2032 = vadd.s32 %v2028, 3
    %v2033 = vand.u32 %v2032, 3
    %vm2034 = vcmp.lt.s32.totalorder %v2033, 2
    %vm2035 = vcmp.eq.s32.totalorder %v2033, 0
    %v2036 = vxor.u32 %v2030, 2147483648
    %v2037 = vsel %vm2035, %v2029, %v2036
    %vm2038 = vcmp.eq.s32.totalorder %v2033, 2
    %v2039 = vxor.u32 %v2029, 2147483648
    %v2040 = vsel %vm2038, %v2039, %v2030
    %v2041 = vsel %vm2034, %v2037, %v2040
    %v2042 = vsel %vm2031, nan, %v2041
    %s2043 = scalar_lea.vmem [#allocation5], 88
    %2044 = vst [vmem:[%s2043] sm:$0xff] %v2042
    %v2045 = vand.u32 2147483647, %v1938
    %vm2046 = vcmp.le.f32.partialorder %v2045, 0.7853982
    %vm2047 = vcmp.lt.s32.totalorder %v1938, 0
    %v2048 = vand.u32 %v1938, 2139095040
    %v2049 = vshrl.u32 %v2048, 23
    %v2050 = vsub.s32 %v2049, 127
    %v2051 = vand.u32 2147483647, %v1938
    %v2052 = vand.u32 %v2051, 8388607
    %v2053 = vor.u32 %v2052, 8388608
    %v2054 = vsub.s32 0, %v2053
    %v2055 = vadd.s32 %v2050, 1
    %vm2056 = vcmp.gt.s32.totalorder %v2055, 0
    %v2057 = vsel %vm2056, %v2055, 0
    %v2058 = vshrl.u32 %v2057, 5
    %v2059 = vand.u32 %v2057, 31
    %v2060 = vsub.s32 32, %v2059
    %v2061 = vshrl.u32 683565275, %v2060
    %v2062 = vshll.u32 683565275, %v2059
    %v2063 = vshrl.u32 2475754826, %v2060
    %v2064 = vor.u32 %v2062, %v2063
    %v2065 = vshll.u32 2475754826, %v2059
    %v2066 = vshrl.u32 2131351028, %v2060
    %v2067 = vor.u32 %v2065, %v2066
    %v2068 = vshll.u32 2131351028, %v2059
    %v2069 = vshrl.u32 2102212464, %v2060
    %v2070 = vor.u32 %v2068, %v2069
    %v2071 = vshll.u32 2102212464, %v2059
    %v2072 = vshrl.u32 920167782, %v2060
    %v2073 = vor.u32 %v2071, %v2072
    %v2074 = vshll.u32 920167782, %v2059
    %v2075 = vshrl.u32 1326507024, %v2060
    %v2076 = vor.u32 %v2074, %v2075
    %vm2077 = vcmp.lt.s32.totalorder %v2058, 1
    %vm2078 = vcmp.lt.s32.totalorder %v2058, 2
    %vm2079 = vcmp.lt.s32.totalorder %v2058, 3
    %vm2080 = vcmp.lt.s32.totalorder %v2058, 4
    %v2081 = vsel %vm2077, %v2061, %v2064
    %v2082 = vsel %vm2080, %v2070, 2102212464
    %v2083 = vsel %vm2079, %v2067, %v2082
    %v2084 = vsel %vm2078, %v2081, %v2083
    %v2085 = vsel %vm2077, %v2064, %v2067
    %v2086 = vsel %vm2080, %v2073, 920167782
    %v2087 = vsel %vm2079, %v2070, %v2086
    %v2088 = vsel %vm2078, %v2085, %v2087
    %v2089 = vsel %vm2077, %v2067, %v2070
    %v2090 = vsel %vm2080, %v2076, 1326507024
    %v2091 = vsel %vm2079, %v2073, %v2090
    %v2092 = vsel %vm2078, %v2089, %v2091
    %v2093 = vshll.u32 %v2053, 8
    %v2094 = vmul.u32.u64.compose %v2093, %v2092
    %v2095 = vextract.low.u32 %v2094
    %v2096 = vextract.high.u32 %v2094
    %v2097 = vmul.u32.u64.compose %v2093, %v2088
    %v2098 = vextract.low.u32 %v2097
    %v2099 = vextract.high.u32 %v2097
    %v2100 = vmul.u32 %v2093, %v2084
    %v2101 = vadd.s32 %v2096, %v2098
    %vm2102 = vc.u32 %v2096, %v2098
    %v2103 = vadd.s32 %v2099, 1
    %v2104 = vsel %vm2102, %v2103, %v2099
    %v2105 = vadd.s32 %v2100, %v2104
    %v2106 = vadd.s32 %v2105, 536870912
    %v2107 = vshrl.u32 %v2106, 30
    %v2108 = vshll.u32 %v2107, 30
    %v2109 = vsub.s32 %v2105, %v2108
    %vm2110 = vcmp.lt.s32.totalorder %v2109, 0
    %v2111 = vsub.s32 0, %v2109
    %v2112 = vsel %vm2110, %v2111, %v2109
    %v2113 = vclz %v2112
    %v2114 = vsub.s32 %v2113, 2
    %vm2115 = vcmp.gt.s32.totalorder 0, %v2114
    %v2116 = vsel %vm2115, 0, %v2114
    %v2117 = vsub.s32 32, %v2116
    %v2118 = vshll.u32 %v2109, %v2116
    %v2119 = vshrl.u32 %v2101, %v2117
    %v2120 = vor.u32 %v2118, %v2119
    %v2121 = vsub.s32 4294967266, %v2116
    %v2122 = vadd.s32 %v2121, 127
    %v2123 = vshll.u32 %v2122, 23
    %v2124 = vor.u32 4788187, %v2123
    %v2125 = vand.u32 2147483647, %v2124
    %v2127 = vcvt.s32.f32 %v2120
    %v2128 = vmul.f32 %v2127, %v2125
    %v2129 = vxor.u32 %v2128, 2147483648
    %v2130 = vsel %vm2047, %v2129, %v2128
    %v2131 = vsub.s32 4, %v2107
    %v2132 = vsel %vm2047, %v2131, %v2107
    %v2133 = vsel %vm2046, %v1938, %v2130
    %v2134 = vsel %vm2046, 0, %v2132
    %v2135 = vcosq.f32.pop %v2133
    %v2136 = vsinq.f32.pop %v2133
    %vm2137 = vweird.f32 %v1938
    %v2138 = vand.u32 %v2134, 3
    %vm2139 = vcmp.lt.s32.totalorder %v2138, 2
    %vm2140 = vcmp.eq.s32.totalorder %v2138, 0
    %v2141 = vxor.u32 %v2136, 2147483648
    %v2142 = vsel %vm2140, %v2135, %v2141
    %vm2143 = vcmp.eq.s32.totalorder %v2138, 2
    %v2144 = vxor.u32 %v2135, 2147483648
    %v2145 = vsel %vm2143, %v2144, %v2136
    %v2146 = vsel %vm2139, %v2142, %v2145
    %v2147 = vsel %vm2137, nan, %v2146
    %s2148 = scalar_lea.vmem [#allocation5], 112
    %2149 = vst [vmem:[%s2148] sm:$0xff] %v2147
    %v2150 = vmul.f32 %v1724, 4.0
    %v2151 = vand.u32 2147483647, %v2150
    %vm2152 = vcmp.le.f32.partialorder %v2151, 0.7853982
    %vm2153 = vcmp.lt.s32.totalorder %v2150, 0
    %v2154 = vand.u32 %v2150, 2139095040
    %v2155 = vshrl.u32 %v2154, 23
    %v2156 = vsub.s32 %v2155, 127
    %v2157 = vand.u32 2147483647, %v2150
    %v2158 = vand.u32 %v2157, 8388607
    %v2159 = vor.u32 %v2158, 8388608
    %v2160 = vsub.s32 0, %v2159
    %v2161 = vadd.s32 %v2156, 1
    %vm2162 = vcmp.gt.s32.totalorder %v2161, 0
    %v2163 = vsel %vm2162, %v2161, 0
    %v2164 = vshrl.u32 %v2163, 5
    %v2165 = vand.u32 %v2163, 31
    %v2166 = vsub.s32 32, %v2165
    %v2167 = vshrl.u32 683565275, %v2166
    %v2168 = vshll.u32 683565275, %v2165
    %v2169 = vshrl.u32 2475754826, %v2166
    %v2170 = vor.u32 %v2168, %v2169
    %v2171 = vshll.u32 2475754826, %v2165
    %v2172 = vshrl.u32 2131351028, %v2166
    %v2173 = vor.u32 %v2171, %v2172
    %v2174 = vshll.u32 2131351028, %v2165
    %v2175 = vshrl.u32 2102212464, %v2166
    %v2176 = vor.u32 %v2174, %v2175
    %v2177 = vshll.u32 2102212464, %v2165
    %v2178 = vshrl.u32 920167782, %v2166
    %v2179 = vor.u32 %v2177, %v2178
    %v2180 = vshll.u32 920167782, %v2165
    %v2181 = vshrl.u32 1326507024, %v2166
    %v2182 = vor.u32 %v2180, %v2181
    %vm2183 = vcmp.lt.s32.totalorder %v2164, 1
    %vm2184 = vcmp.lt.s32.totalorder %v2164, 2
    %vm2185 = vcmp.lt.s32.totalorder %v2164, 3
    %vm2186 = vcmp.lt.s32.totalorder %v2164, 4
    %v2187 = vsel %vm2183, %v2167, %v2170
    %v2188 = vsel %vm2186, %v2176, 2102212464
    %v2189 = vsel %vm2185, %v2173, %v2188
    %v2190 = vsel %vm2184, %v2187, %v2189
    %v2191 = vsel %vm2183, %v2170, %v2173
    %v2192 = vsel %vm2186, %v2179, 920167782
    %v2193 = vsel %vm2185, %v2176, %v2192
    %v2194 = vsel %vm2184, %v2191, %v2193
    %v2195 = vsel %vm2183, %v2173, %v2176
    %v2196 = vsel %vm2186, %v2182, 1326507024
    %v2197 = vsel %vm2185, %v2179, %v2196
    %v2198 = vsel %vm2184, %v2195, %v2197
    %v2199 = vshll.u32 %v2159, 8
    %v2200 = vmul.u32.u64.compose %v2199, %v2198
    %v2201 = vextract.low.u32 %v2200
    %v2202 = vextract.high.u32 %v2200
    %v2203 = vmul.u32.u64.compose %v2199, %v2194
    %v2204 = vextract.low.u32 %v2203
    %v2205 = vextract.high.u32 %v2203
    %v2206 = vmul.u32 %v2199, %v2190
    %v2207 = vadd.s32 %v2202, %v2204
    %vm2208 = vc.u32 %v2202, %v2204
    %v2209 = vadd.s32 %v2205, 1
    %v2210 = vsel %vm2208, %v2209, %v2205
    %v2211 = vadd.s32 %v2206, %v2210
    %v2212 = vadd.s32 %v2211, 536870912
    %v2213 = vshrl.u32 %v2212, 30
    %v2214 = vshll.u32 %v2213, 30
    %v2215 = vsub.s32 %v2211, %v2214
    %vm2216 = vcmp.lt.s32.totalorder %v2215, 0
    %v2217 = vsub.s32 0, %v2215
    %v2218 = vsel %vm2216, %v2217, %v2215
    %v2219 = vclz %v2218
    %v2220 = vsub.s32 %v2219, 2
    %vm2221 = vcmp.gt.s32.totalorder 0, %v2220
    %v2222 = vsel %vm2221, 0, %v2220
    %v2223 = vsub.s32 32, %v2222
    %v2224 = vshll.u32 %v2215, %v2222
    %v2225 = vshrl.u32 %v2207, %v2223
    %v2226 = vor.u32 %v2224, %v2225
    %v2227 = vsub.s32 4294967266, %v2222
    %v2228 = vadd.s32 %v2227, 127
    %v2229 = vshll.u32 %v2228, 23
    %v2230 = vor.u32 4788187, %v2229
    %v2231 = vand.u32 2147483647, %v2230
    %v2233 = vcvt.s32.f32 %v2226
    %v2234 = vmul.f32 %v2233, %v2231
    %v2235 = vxor.u32 %v2234, 2147483648
    %v2236 = vsel %vm2153, %v2235, %v2234
    %v2237 = vsub.s32 4, %v2213
    %v2238 = vsel %vm2153, %v2237, %v2213
    %v2239 = vsel %vm2152, %v2150, %v2236
    %v2240 = vsel %vm2152, 0, %v2238
    %v2241 = vcosq.f32.pop %v2239
    %v2242 = vsinq.f32.pop %v2239
    %vm2243 = vweird.f32 %v2150
    %v2244 = vadd.s32 %v2240, 3
    %v2245 = vand.u32 %v2244, 3
    %vm2246 = vcmp.lt.s32.totalorder %v2245, 2
    %vm2247 = vcmp.eq.s32.totalorder %v2245, 0
    %v2248 = vxor.u32 %v2242, 2147483648
    %v2249 = vsel %vm2247, %v2241, %v2248
    %vm2250 = vcmp.eq.s32.totalorder %v2245, 2
    %v2251 = vxor.u32 %v2241, 2147483648
    %v2252 = vsel %vm2250, %v2251, %v2242
    %v2253 = vsel %vm2246, %v2249, %v2252
    %v2254 = vsel %vm2243, nan, %v2253
    %s2255 = scalar_lea.vmem [#allocation5], 136
    %2256 = vst [vmem:[%s2255] sm:$0xff] %v2254
    %v2257 = vand.u32 2147483647, %v2150
    %vm2258 = vcmp.le.f32.partialorder %v2257, 0.7853982
    %vm2259 = vcmp.lt.s32.totalorder %v2150, 0
    %v2260 = vand.u32 %v2150, 2139095040
    %v2261 = vshrl.u32 %v2260, 23
    %v2262 = vsub.s32 %v2261, 127
    %v2263 = vand.u32 2147483647, %v2150
    %v2264 = vand.u32 %v2263, 8388607
    %v2265 = vor.u32 %v2264, 8388608
    %v2266 = vsub.s32 0, %v2265
    %v2267 = vadd.s32 %v2262, 1
    %vm2268 = vcmp.gt.s32.totalorder %v2267, 0
    %v2269 = vsel %vm2268, %v2267, 0
    %v2270 = vshrl.u32 %v2269, 5
    %v2271 = vand.u32 %v2269, 31
    %v2272 = vsub.s32 32, %v2271
    %v2273 = vshrl.u32 683565275, %v2272
    %v2274 = vshll.u32 683565275, %v2271
    %v2275 = vshrl.u32 2475754826, %v2272
    %v2276 = vor.u32 %v2274, %v2275
    %v2277 = vshll.u32 2475754826, %v2271
    %v2278 = vshrl.u32 2131351028, %v2272
    %v2279 = vor.u32 %v2277, %v2278
    %v2280 = vshll.u32 2131351028, %v2271
    %v2281 = vshrl.u32 2102212464, %v2272
    %v2282 = vor.u32 %v2280, %v2281
    %v2283 = vshll.u32 2102212464, %v2271
    %v2284 = vshrl.u32 920167782, %v2272
    %v2285 = vor.u32 %v2283, %v2284
    %v2286 = vshll.u32 920167782, %v2271
    %v2287 = vshrl.u32 1326507024, %v2272
    %v2288 = vor.u32 %v2286, %v2287
    %vm2289 = vcmp.lt.s32.totalorder %v2270, 1
    %vm2290 = vcmp.lt.s32.totalorder %v2270, 2
    %vm2291 = vcmp.lt.s32.totalorder %v2270, 3
    %vm2292 = vcmp.lt.s32.totalorder %v2270, 4
    %v2293 = vsel %vm2289, %v2273, %v2276
    %v2294 = vsel %vm2292, %v2282, 2102212464
    %v2295 = vsel %vm2291, %v2279, %v2294
    %v2296 = vsel %vm2290, %v2293, %v2295
    %v2297 = vsel %vm2289, %v2276, %v2279
    %v2298 = vsel %vm2292, %v2285, 920167782
    %v2299 = vsel %vm2291, %v2282, %v2298
    %v2300 = vsel %vm2290, %v2297, %v2299
    %v2301 = vsel %vm2289, %v2279, %v2282
    %v2302 = vsel %vm2292, %v2288, 1326507024
    %v2303 = vsel %vm2291, %v2285, %v2302
    %v2304 = vsel %vm2290, %v2301, %v2303
    %v2305 = vshll.u32 %v2265, 8
    %v2306 = vmul.u32.u64.compose %v2305, %v2304
    %v2307 = vextract.low.u32 %v2306
    %v2308 = vextract.high.u32 %v2306
    %v2309 = vmul.u32.u64.compose %v2305, %v2300
    %v2310 = vextract.low.u32 %v2309
    %v2311 = vextract.high.u32 %v2309
    %v2312 = vmul.u32 %v2305, %v2296
    %v2313 = vadd.s32 %v2308, %v2310
    %vm2314 = vc.u32 %v2308, %v2310
    %v2315 = vadd.s32 %v2311, 1
    %v2316 = vsel %vm2314, %v2315, %v2311
    %v2317 = vadd.s32 %v2312, %v2316
    %v2318 = vadd.s32 %v2317, 536870912
    %v2319 = vshrl.u32 %v2318, 30
    %v2320 = vshll.u32 %v2319, 30
    %v2321 = vsub.s32 %v2317, %v2320
    %vm2322 = vcmp.lt.s32.totalorder %v2321, 0
    %v2323 = vsub.s32 0, %v2321
    %v2324 = vsel %vm2322, %v2323, %v2321
    %v2325 = vclz %v2324
    %v2326 = vsub.s32 %v2325, 2
    %vm2327 = vcmp.gt.s32.totalorder 0, %v2326
    %v2328 = vsel %vm2327, 0, %v2326
    %v2329 = vsub.s32 32, %v2328
    %v2330 = vshll.u32 %v2321, %v2328
    %v2331 = vshrl.u32 %v2313, %v2329
    %v2332 = vor.u32 %v2330, %v2331
    %v2333 = vsub.s32 4294967266, %v2328
    %v2334 = vadd.s32 %v2333, 127
    %v2335 = vshll.u32 %v2334, 23
    %v2336 = vor.u32 4788187, %v2335
    %v2337 = vand.u32 2147483647, %v2336
    %v2339 = vcvt.s32.f32 %v2332
    %v2340 = vmul.f32 %v2339, %v2337
    %v2341 = vxor.u32 %v2340, 2147483648
    %v2342 = vsel %vm2259, %v2341, %v2340
    %v2343 = vsub.s32 4, %v2319
    %v2344 = vsel %vm2259, %v2343, %v2319
    %v2345 = vsel %vm2258, %v2150, %v2342
    %v2346 = vsel %vm2258, 0, %v2344
    %v2347 = vcosq.f32.pop %v2345
    %v2348 = vsinq.f32.pop %v2345
    %vm2349 = vweird.f32 %v2150
    %v2350 = vand.u32 %v2346, 3
    %vm2351 = vcmp.lt.s32.totalorder %v2350, 2
    %vm2352 = vcmp.eq.s32.totalorder %v2350, 0
    %v2353 = vxor.u32 %v2348, 2147483648
    %v2354 = vsel %vm2352, %v2347, %v2353
    %vm2355 = vcmp.eq.s32.totalorder %v2350, 2
    %v2356 = vxor.u32 %v2347, 2147483648
    %v2357 = vsel %vm2355, %v2356, %v2348
    %v2358 = vsel %vm2351, %v2354, %v2357
    %v2359 = vsel %vm2349, nan, %v2358
    %s2360 = scalar_lea.vmem [#allocation5], 160
    %2361 = vst [vmem:[%s2360] sm:$0xff] %v2359
    %v2362 = vmul.f32 %v1724, 8.0
    %v2363 = vand.u32 2147483647, %v2362
    %vm2364 = vcmp.le.f32.partialorder %v2363, 0.7853982
    %vm2365 = vcmp.lt.s32.totalorder %v2362, 0
    %v2366 = vand.u32 %v2362, 2139095040
    %v2367 = vshrl.u32 %v2366, 23
    %v2368 = vsub.s32 %v2367, 127
    %v2369 = vand.u32 2147483647, %v2362
    %v2370 = vand.u32 %v2369, 8388607
    %v2371 = vor.u32 %v2370, 8388608
    %v2372 = vsub.s32 0, %v2371
    %v2373 = vadd.s32 %v2368, 1
    %vm2374 = vcmp.gt.s32.totalorder %v2373, 0
    %v2375 = vsel %vm2374, %v2373, 0
    %v2376 = vshrl.u32 %v2375, 5
    %v2377 = vand.u32 %v2375, 31
    %v2378 = vsub.s32 32, %v2377
    %v2379 = vshrl.u32 683565275, %v2378
    %v2380 = vshll.u32 683565275, %v2377
    %v2381 = vshrl.u32 2475754826, %v2378
    %v2382 = vor.u32 %v2380, %v2381
    %v2383 = vshll.u32 2475754826, %v2377
    %v2384 = vshrl.u32 2131351028, %v2378
    %v2385 = vor.u32 %v2383, %v2384
    %v2386 = vshll.u32 2131351028, %v2377
    %v2387 = vshrl.u32 2102212464, %v2378
    %v2388 = vor.u32 %v2386, %v2387
    %v2389 = vshll.u32 2102212464, %v2377
    %v2390 = vshrl.u32 920167782, %v2378
    %v2391 = vor.u32 %v2389, %v2390
    %v2392 = vshll.u32 920167782, %v2377
    %v2393 = vshrl.u32 1326507024, %v2378
    %v2394 = vor.u32 %v2392, %v2393
    %vm2395 = vcmp.lt.s32.totalorder %v2376, 1
    %vm2396 = vcmp.lt.s32.totalorder %v2376, 2
    %vm2397 = vcmp.lt.s32.totalorder %v2376, 3
    %vm2398 = vcmp.lt.s32.totalorder %v2376, 4
    %v2399 = vsel %vm2395, %v2379, %v2382
    %v2400 = vsel %vm2398, %v2388, 2102212464
    %v2401 = vsel %vm2397, %v2385, %v2400
    %v2402 = vsel %vm2396, %v2399, %v2401
    %v2403 = vsel %vm2395, %v2382, %v2385
    %v2404 = vsel %vm2398, %v2391, 920167782
    %v2405 = vsel %vm2397, %v2388, %v2404
    %v2406 = vsel %vm2396, %v2403, %v2405
    %v2407 = vsel %vm2395, %v2385, %v2388
    %v2408 = vsel %vm2398, %v2394, 1326507024
    %v2409 = vsel %vm2397, %v2391, %v2408
    %v2410 = vsel %vm2396, %v2407, %v2409
    %v2411 = vshll.u32 %v2371, 8
    %v2412 = vmul.u32.u64.compose %v2411, %v2410
    %v2413 = vextract.low.u32 %v2412
    %v2414 = vextract.high.u32 %v2412
    %v2415 = vmul.u32.u64.compose %v2411, %v2406
    %v2416 = vextract.low.u32 %v2415
    %v2417 = vextract.high.u32 %v2415
    %v2418 = vmul.u32 %v2411, %v2402
    %v2419 = vadd.s32 %v2414, %v2416
    %vm2420 = vc.u32 %v2414, %v2416
    %v2421 = vadd.s32 %v2417, 1
    %v2422 = vsel %vm2420, %v2421, %v2417
    %v2423 = vadd.s32 %v2418, %v2422
    %v2424 = vadd.s32 %v2423, 536870912
    %v2425 = vshrl.u32 %v2424, 30
    %v2426 = vshll.u32 %v2425, 30
    %v2427 = vsub.s32 %v2423, %v2426
    %vm2428 = vcmp.lt.s32.totalorder %v2427, 0
    %v2429 = vsub.s32 0, %v2427
    %v2430 = vsel %vm2428, %v2429, %v2427
    %v2431 = vclz %v2430
    %v2432 = vsub.s32 %v2431, 2
    %vm2433 = vcmp.gt.s32.totalorder 0, %v2432
    %v2434 = vsel %vm2433, 0, %v2432
    %v2435 = vsub.s32 32, %v2434
    %v2436 = vshll.u32 %v2427, %v2434
    %v2437 = vshrl.u32 %v2419, %v2435
    %v2438 = vor.u32 %v2436, %v2437
    %v2439 = vsub.s32 4294967266, %v2434
    %v2440 = vadd.s32 %v2439, 127
    %v2441 = vshll.u32 %v2440, 23
    %v2442 = vor.u32 4788187, %v2441
    %v2443 = vand.u32 2147483647, %v2442
    %v2445 = vcvt.s32.f32 %v2438
    %v2446 = vmul.f32 %v2445, %v2443
    %v2447 = vxor.u32 %v2446, 2147483648
    %v2448 = vsel %vm2365, %v2447, %v2446
    %v2449 = vsub.s32 4, %v2425
    %v2450 = vsel %vm2365, %v2449, %v2425
    %v2451 = vsel %vm2364, %v2362, %v2448
    %v2452 = vsel %vm2364, 0, %v2450
    %v2453 = vcosq.f32.pop %v2451
    %v2454 = vsinq.f32.pop %v2451
    %vm2455 = vweird.f32 %v2362
    %v2456 = vadd.s32 %v2452, 3
    %v2457 = vand.u32 %v2456, 3
    %vm2458 = vcmp.lt.s32.totalorder %v2457, 2
    %vm2459 = vcmp.eq.s32.totalorder %v2457, 0
    %v2460 = vxor.u32 %v2454, 2147483648
    %v2461 = vsel %vm2459, %v2453, %v2460
    %vm2462 = vcmp.eq.s32.totalorder %v2457, 2
    %v2463 = vxor.u32 %v2453, 2147483648
    %v2464 = vsel %vm2462, %v2463, %v2454
    %v2465 = vsel %vm2458, %v2461, %v2464
    %v2466 = vsel %vm2455, nan, %v2465
    %s2467 = scalar_lea.vmem [#allocation5], 184
    %2468 = vst [vmem:[%s2467] sm:$0xff] %v2466
    %v2469 = vand.u32 2147483647, %v2362
    %vm2470 = vcmp.le.f32.partialorder %v2469, 0.7853982
    %vm2471 = vcmp.lt.s32.totalorder %v2362, 0
    %v2472 = vand.u32 %v2362, 2139095040
    %v2473 = vshrl.u32 %v2472, 23
    %v2474 = vsub.s32 %v2473, 127
    %v2475 = vand.u32 2147483647, %v2362
    %v2476 = vand.u32 %v2475, 8388607
    %v2477 = vor.u32 %v2476, 8388608
    %v2478 = vsub.s32 0, %v2477
    %v2479 = vadd.s32 %v2474, 1
    %vm2480 = vcmp.gt.s32.totalorder %v2479, 0
    %v2481 = vsel %vm2480, %v2479, 0
    %v2482 = vshrl.u32 %v2481, 5
    %v2483 = vand.u32 %v2481, 31
    %v2484 = vsub.s32 32, %v2483
    %v2485 = vshrl.u32 683565275, %v2484
    %v2486 = vshll.u32 683565275, %v2483
    %v2487 = vshrl.u32 2475754826, %v2484
    %v2488 = vor.u32 %v2486, %v2487
    %v2489 = vshll.u32 2475754826, %v2483
    %v2490 = vshrl.u32 2131351028, %v2484
    %v2491 = vor.u32 %v2489, %v2490
    %v2492 = vshll.u32 2131351028, %v2483
    %v2493 = vshrl.u32 2102212464, %v2484
    %v2494 = vor.u32 %v2492, %v2493
    %v2495 = vshll.u32 2102212464, %v2483
    %v2496 = vshrl.u32 920167782, %v2484
    %v2497 = vor.u32 %v2495, %v2496
    %v2498 = vshll.u32 920167782, %v2483
    %v2499 = vshrl.u32 1326507024, %v2484
    %v2500 = vor.u32 %v2498, %v2499
    %vm2501 = vcmp.lt.s32.totalorder %v2482, 1
    %vm2502 = vcmp.lt.s32.totalorder %v2482, 2
    %vm2503 = vcmp.lt.s32.totalorder %v2482, 3
    %vm2504 = vcmp.lt.s32.totalorder %v2482, 4
    %v2505 = vsel %vm2501, %v2485, %v2488
    %v2506 = vsel %vm2504, %v2494, 2102212464
    %v2507 = vsel %vm2503, %v2491, %v2506
    %v2508 = vsel %vm2502, %v2505, %v2507
    %v2509 = vsel %vm2501, %v2488, %v2491
    %v2510 = vsel %vm2504, %v2497, 920167782
    %v2511 = vsel %vm2503, %v2494, %v2510
    %v2512 = vsel %vm2502, %v2509, %v2511
    %v2513 = vsel %vm2501, %v2491, %v2494
    %v2514 = vsel %vm2504, %v2500, 1326507024
    %v2515 = vsel %vm2503, %v2497, %v2514
    %v2516 = vsel %vm2502, %v2513, %v2515
    %v2517 = vshll.u32 %v2477, 8
    %v2518 = vmul.u32.u64.compose %v2517, %v2516
    %v2519 = vextract.low.u32 %v2518
    %v2520 = vextract.high.u32 %v2518
    %v2521 = vmul.u32.u64.compose %v2517, %v2512
    %v2522 = vextract.low.u32 %v2521
    %v2523 = vextract.high.u32 %v2521
    %v2524 = vmul.u32 %v2517, %v2508
    %v2525 = vadd.s32 %v2520, %v2522
    %vm2526 = vc.u32 %v2520, %v2522
    %v2527 = vadd.s32 %v2523, 1
    %v2528 = vsel %vm2526, %v2527, %v2523
    %v2529 = vadd.s32 %v2524, %v2528
    %v2530 = vadd.s32 %v2529, 536870912
    %v2531 = vshrl.u32 %v2530, 30
    %v2532 = vshll.u32 %v2531, 30
    %v2533 = vsub.s32 %v2529, %v2532
    %vm2534 = vcmp.lt.s32.totalorder %v2533, 0
    %v2535 = vsub.s32 0, %v2533
    %v2536 = vsel %vm2534, %v2535, %v2533
    %v2537 = vclz %v2536
    %v2538 = vsub.s32 %v2537, 2
    %vm2539 = vcmp.gt.s32.totalorder 0, %v2538
    %v2540 = vsel %vm2539, 0, %v2538
    %v2541 = vsub.s32 32, %v2540
    %v2542 = vshll.u32 %v2533, %v2540
    %v2543 = vshrl.u32 %v2525, %v2541
    %v2544 = vor.u32 %v2542, %v2543
    %v2545 = vsub.s32 4294967266, %v2540
    %v2546 = vadd.s32 %v2545, 127
    %v2547 = vshll.u32 %v2546, 23
    %v2548 = vor.u32 4788187, %v2547
    %v2549 = vand.u32 2147483647, %v2548
    %v2551 = vcvt.s32.f32 %v2544
    %v2552 = vmul.f32 %v2551, %v2549
    %v2553 = vxor.u32 %v2552, 2147483648
    %v2554 = vsel %vm2471, %v2553, %v2552
    %v2555 = vsub.s32 4, %v2531
    %v2556 = vsel %vm2471, %v2555, %v2531
    %v2557 = vsel %vm2470, %v2362, %v2554
    %v2558 = vsel %vm2470, 0, %v2556
    %v2559 = vcosq.f32.pop %v2557
    %v2560 = vsinq.f32.pop %v2557
    %vm2561 = vweird.f32 %v2362
    %v2562 = vand.u32 %v2558, 3
    %vm2563 = vcmp.lt.s32.totalorder %v2562, 2
    %vm2564 = vcmp.eq.s32.totalorder %v2562, 0
    %v2565 = vxor.u32 %v2560, 2147483648
    %v2566 = vsel %vm2564, %v2559, %v2565
    %vm2567 = vcmp.eq.s32.totalorder %v2562, 2
    %v2568 = vxor.u32 %v2559, 2147483648
    %v2569 = vsel %vm2567, %v2568, %v2560
    %v2570 = vsel %vm2563, %v2566, %v2569
    %v2571 = vsel %vm2561, nan, %v2570
    %s2572 = scalar_lea.vmem [#allocation5], 208
    %2573 = vst [vmem:[%s2572] sm:$0xff] %v2571
    // Predicated region
    $region10: #{tpu_custom_call.1} parent=1 // pred_check
      _
    $region11: #{tpu_custom_call.1} parent=1 // pred_check_branch
      %2575 = sbr.rel (0) target = $region13
    $region12: #{tpu_custom_call.1} parent=1 // pred_region
      %s2577 = ssub.s32 3456, 3456
      %2578 = vsyncadd [#allocation4], %s2577
      %s2579 = sshll.u32 [#allocation5], 4
      %s2580 = int_to_ptr.vmem [resolvable:$true] %s2579
      %2585 = dma.vmem_to_hbm [thread:$0]  %s2580, 3456, %s1, [#allocation4], 128, 128, 8
    $region13: #{tpu_custom_call.1} parent=1 // pred_fallthru
      _
    // Predicated region
    $region14: #{tpu_custom_call.1} parent=1 // pred_check
      _
    $region15: #{tpu_custom_call.1} parent=1 // pred_check_branch
      %2587 = sbr.rel (0) target = $region17
    $region16: #{tpu_custom_call.1} parent=1 // pred_region
      %2588 = dma.done [#allocation4], 3456
    $region17: #{tpu_custom_call.1} parent=1 // pred_fallthru
      _
    %2589 = vsyncpa [#allocation3], 1
    %2590 = vsyncpa [#allocation4], 1

</llo_original>
